<compile_context>
chip_gen: v7x
topology: tpu7x:2x2x1
jax: 0.10.0
libtpu: 0.0.40
codegen_flags: <defaults>
</compile_context>

<pallas_src>
import jax
import jax.numpy as jnp
from jax.experimental import pallas as pl
from jax.experimental.pallas import tpu as pltpu


def cnn_kernel(x_ref, w1_ref, b1_ref, w2_ref, b2_ref,
               fw1_ref, fb1_ref, fw2_ref, fb2_ref, o_ref):
    TB, Lp2, Cin = x_ref.shape
    L = Lp2 - 2
    K = w1_ref.shape[0] // Cin           # kernel_size (3)
    C1P = w1_ref.shape[1]                # conv1 out channels, lane-padded (128)
    C2P = w2_ref.shape[1]                # conv2 out channels (128)

    # ---- conv1 + ReLU: K taps fused via im2col into one MXU matmul ----
    xp = x_ref[...]                                                # (TB, L+2, Cin) f32
    cols1 = jnp.concatenate([xp[:, k:k + L, :] for k in range(K)], axis=-1)
    cols1 = cols1.reshape(TB * L, K * Cin).astype(jnp.bfloat16)
    acc1 = jnp.dot(cols1, w1_ref[...], preferred_element_type=jnp.float32)
    h1 = jnp.maximum(acc1 + b1_ref[...], 0.0)                      # (TB*L, C1P) f32

    # ---- conv2 + ReLU (padding=1 halo built in-kernel, then im2col) ----
    zh = jnp.zeros((TB, 1, C1P), jnp.float32)
    hp = jnp.concatenate([zh, h1.reshape(TB, L, C1P), zh], axis=1)  # (TB, L+2, C1P)
    cols2 = jnp.concatenate([hp[:, k:k + L, :] for k in range(K)], axis=-1)
    cols2 = cols2.reshape(TB * L, K * C1P).astype(jnp.bfloat16)
    acc2 = jnp.dot(cols2, w2_ref[...], preferred_element_type=jnp.float32)
    h2 = jnp.maximum(acc2 + b2_ref[...], 0.0)                      # (TB*L, C2P) f32

    # ---- torch.mean(x, dim=2): average over the sequence axis ----
    pooled = jnp.sum(h2.reshape(TB, L, C2P), axis=1) * (1.0 / L)   # (TB, C2P)

    # ---- fc1 + ReLU ----
    f1 = jnp.maximum(
        jnp.dot(pooled.astype(jnp.bfloat16), fw1_ref[...],
                preferred_element_type=jnp.float32) + fb1_ref[...], 0.0)

    # dropout(p=0.3) is identity at inference time
    # TODO(synk): training-mode dropout (random mask + 1/(1-p) scaling) not implemented.

    # ---- fc2 ----
    out = (jnp.dot(f1.astype(jnp.bfloat16), fw2_ref[...],
                   preferred_element_type=jnp.float32) + fb2_ref[...])
    o_ref[...] = out.astype(o_ref.dtype)


def _pad_to(a, axis, target):
    pad = target - a.shape[axis]
    if pad <= 0:
        return a
    widths = [(0, 0)] * a.ndim
    widths[axis] = (0, pad)
    return jnp.pad(a, widths)


def _pick_batch_tile(B, L, target_rows=256):
    """Largest divisor of B that is a multiple of 8 (or B itself) with TB*L <= target."""
    valid = [d for d in range(1, B + 1) if B % d == 0 and (d % 8 == 0 or d == B)]
    fitting = [d for d in valid if d * L <= target_rows]
    return max(fitting) if fitting else min(valid)


def cnn_forward(x_ncl, params):
    """x_ncl: (B, C_in, L), matching PyTorch Conv1d input layout."""
    w1, b1, w2, b2, fw1, fb1, fw2, fb2 = params
    B, Cin, L = x_ncl.shape
    K, _, C1 = w1.shape
    C2 = w2.shape[2]
    F1 = fw1.shape[1]
    out_size = fw2.shape[1]

    LANE = 128
    C1P = ((C1 + LANE - 1) // LANE) * LANE          # 64  -> 128 (lane-dense h1)
    C2P = ((C2 + LANE - 1) // LANE) * LANE          # 128 -> 128
    F1P = ((F1 + LANE - 1) // LANE) * LANE          # 64  -> 128
    OUTP = ((out_size + LANE - 1) // LANE) * LANE   # 8   -> 128

    # Weights: im2col-reshaped, lane-padded, bf16 for the MXU. Biases stay f32.
    w1p = _pad_to(w1, 2, C1P).reshape(K * Cin, C1P).astype(jnp.bfloat16)
    b1p = _pad_to(b1, 1, C1P).astype(jnp.float32)
    w2p = _pad_to(_pad_to(w2, 1, C1P), 2, C2P).reshape(K * C1P, C2P).astype(jnp.bfloat16)
    b2p = _pad_to(b2, 1, C2P).astype(jnp.float32)
    fw1p = _pad_to(_pad_to(fw1, 0, C2P), 1, F1P).astype(jnp.bfloat16)
    fb1p = _pad_to(fb1, 1, F1P).astype(jnp.float32)
    fw2p = _pad_to(_pad_to(fw2, 0, F1P), 1, OUTP).astype(jnp.bfloat16)
    fb2p = _pad_to(fb2, 1, OUTP).astype(jnp.float32)

    # Glue: NCL -> NLC (channels on lanes) + one-time seq halo pad for conv1.
    x_nlc = jnp.transpose(x_ncl, (0, 2, 1)).astype(jnp.float32)
    x_pad = jnp.pad(x_nlc, ((0, 0), (1, 1), (0, 0)))               # (B, L+2, Cin)

    TB = _pick_batch_tile(B, L)
    nb = B // TB

    out_padded = pl.pallas_call(
        cnn_kernel,
        out_shape=jax.ShapeDtypeStruct((B, OUTP), jnp.float32),
        grid=(nb,),
        in_specs=[
            pl.BlockSpec((TB, L + 2, Cin), lambda i: (i, 0, 0)),   # batch-tiled x
            pl.BlockSpec(w1p.shape, lambda i: (0, 0)),             # resident weights
            pl.BlockSpec(b1p.shape, lambda i: (0, 0)),
            pl.BlockSpec(w2p.shape, lambda i: (0, 0)),
            pl.BlockSpec(b2p.shape, lambda i: (0, 0)),
            pl.BlockSpec(fw1p.shape, lambda i: (0, 0)),
            pl.BlockSpec(fb1p.shape, lambda i: (0, 0)),
            pl.BlockSpec(fw2p.shape, lambda i: (0, 0)),
            pl.BlockSpec(fb2p.shape, lambda i: (0, 0)),
        ],
        out_specs=pl.BlockSpec((TB, OUTP), lambda i: (i, 0)),
        compiler_params=pltpu.CompilerParams(
            dimension_semantics=("parallel",),      # megacore-shardable batch axis
            vmem_limit_bytes=32 * 1024 * 1024,
        ),
    )(x_pad, w1p, b1p, w2p, b2p, fw1p, fb1p, fw2p, fb2p)

    return out_padded[:, :out_size]


def init_params(key, cin, out_size, k=3):
    ks = jax.random.split(key, 8)
    # conv weights stored as (K, C_in, C_out); biases as (1, C_out)
    w1 = jax.random.normal(ks[0], (k, cin, 64), jnp.float32) * 0.1
    b1 = jax.random.normal(ks[1], (1, 64), jnp.float32) * 0.1
    w2 = jax.random.normal(ks[2], (k, 64, 128), jnp.float32) * 0.1
    b2 = jax.random.normal(ks[3], (1, 128), jnp.float32) * 0.1
    # fc weights stored as (in, out)
    fw1 = jax.random.normal(ks[4], (128, 64), jnp.float32) * 0.1
    fb1 = jax.random.normal(ks[5], (1, 64), jnp.float32) * 0.1
    fw2 = jax.random.normal(ks[6], (64, out_size), jnp.float32) * 0.1
    fb2 = jax.random.normal(ks[7], (1, out_size), jnp.float32) * 0.1
    return (w1, b1, w2, b2, fw1, fb1, fw2, fb2)


def ref_forward(x_ncl, params):
    """Pure-JAX f32 reference matching the PyTorch forward (eval mode)."""
    w1, b1, w2, b2, fw1, fb1, fw2, fb2 = params
    cw1 = jnp.transpose(w1, (2, 1, 0))             # (Cout, Cin, K)
    cw2 = jnp.transpose(w2, (2, 1, 0))
    h = jax.lax.conv_general_dilated(
        x_ncl, cw1, (1,), [(1, 1)], dimension_numbers=('NCH', 'OIH', 'NCH'))
    h = jax.nn.relu(h + b1.reshape(1, -1, 1))
    h = jax.lax.conv_general_dilated(
        h, cw2, (1,), [(1, 1)], dimension_numbers=('NCH', 'OIH', 'NCH'))
    h = jax.nn.relu(h + b2.reshape(1, -1, 1))
    p = jnp.mean(h, axis=2)
    f = jax.nn.relu(p @ fw1 + fb1)
    return f @ fw2 + fb2


if __name__ == "__main__":
    key = jax.random.PRNGKey(0)
    kx, kp = jax.random.split(key)
    B, CIN, L, OUT = 32, 4, 16, 8                  # small; gives a 2-step grid (TB=16)
    x = jax.random.normal(kx, (B, CIN, L), jnp.float32)
    params = init_params(kp, CIN, OUT)

    y = cnn_forward(x, params)
    jax.block_until_ready(y)

    y_ref = ref_forward(x, params)
    assert y.shape == (B, OUT)
    # bf16 MXU operands (f32 accumulation) -> loosened tolerance vs f32 reference.
    max_err = float(jnp.max(jnp.abs(y - y_ref)))
    assert jnp.allclose(y, y_ref, atol=5e-2, rtol=5e-2), f"mismatch vs reference (max abs err {max_err})"
    print("KERNEL_OK")
</pallas_src>

<mosaic_0001>
module attributes {stable_mosaic.version = 11 : i64} {
  func.func @cnn_kernel(%arg0: i32, %arg1: memref<16x18x4xf32, #tpu.memory_space<vmem>>, %arg2: memref<12x128xbf16, #tpu.memory_space<vmem>>, %arg3: memref<1x128xf32, #tpu.memory_space<vmem>>, %arg4: memref<384x128xbf16, #tpu.memory_space<vmem>>, %arg5: memref<1x128xf32, #tpu.memory_space<vmem>>, %arg6: memref<128x128xbf16, #tpu.memory_space<vmem>>, %arg7: memref<1x128xf32, #tpu.memory_space<vmem>>, %arg8: memref<128x128xbf16, #tpu.memory_space<vmem>>, %arg9: memref<1x128xf32, #tpu.memory_space<vmem>>, %arg10: memref<16x128xf32, #tpu.memory_space<vmem>>) attributes {dimension_semantics = [#tpu.dimension_semantics<parallel>], iteration_bounds = array<i64: 2>, scalar_prefetch = 0 : i64, scratch_operands = 0 : i64, tpu.core_type = #tpu.core_type<tc>, window_params = [{transform_indices = @transform_0, window_bounds = array<i64: 16, 18, 4>}, {pipeline_mode = #tpu.pipeline_mode<synchronous>, transform_indices = @transform_1, window_bounds = array<i64: 12, 128>}, {pipeline_mode = #tpu.pipeline_mode<synchronous>, transform_indices = @transform_2, window_bounds = array<i64: 1, 128>}, {pipeline_mode = #tpu.pipeline_mode<synchronous>, transform_indices = @transform_3, window_bounds = array<i64: 384, 128>}, {pipeline_mode = #tpu.pipeline_mode<synchronous>, transform_indices = @transform_4, window_bounds = array<i64: 1, 128>}, {pipeline_mode = #tpu.pipeline_mode<synchronous>, transform_indices = @transform_5, window_bounds = array<i64: 128, 128>}, {pipeline_mode = #tpu.pipeline_mode<synchronous>, transform_indices = @transform_6, window_bounds = array<i64: 1, 128>}, {pipeline_mode = #tpu.pipeline_mode<synchronous>, transform_indices = @transform_7, window_bounds = array<i64: 128, 128>}, {pipeline_mode = #tpu.pipeline_mode<synchronous>, transform_indices = @transform_8, window_bounds = array<i64: 1, 128>}, {transform_indices = @transform_9, window_bounds = array<i64: 16, 128>}]} {
    %c0 = arith.constant 0 : index
    %c0_0 = arith.constant 0 : index
    %c0_1 = arith.constant 0 : index
    %0 = vector.load %arg1[%c0, %c0_0, %c0_1] : memref<16x18x4xf32, #tpu.memory_space<vmem>>, vector<16x18x4xf32>
    %1 = vector.extract_strided_slice %0 {offsets = [0, 0, 0], sizes = [16, 16, 4], strides = [1, 1, 1]} : vector<16x18x4xf32> to vector<16x16x4xf32>
    %2 = vector.extract_strided_slice %0 {offsets = [0, 1, 0], sizes = [16, 16, 4], strides = [1, 1, 1]} : vector<16x18x4xf32> to vector<16x16x4xf32>
    %3 = vector.extract_strided_slice %0 {offsets = [0, 2, 0], sizes = [16, 16, 4], strides = [1, 1, 1]} : vector<16x18x4xf32> to vector<16x16x4xf32>
    %4 = tpu.concatenate %1, %2, %3 in 2 : vector<16x16x4xf32>, vector<16x16x4xf32>, vector<16x16x4xf32> -> vector<16x16x12xf32>
    %5 = vector.shape_cast %4 : vector<16x16x12xf32> to vector<256x12xf32>
    %6 = arith.truncf %5 : vector<256x12xf32> to vector<256x12xbf16>
    %c0_2 = arith.constant 0 : index
    %c0_3 = arith.constant 0 : index
    %7 = vector.load %arg2[%c0_2, %c0_3] : memref<12x128xbf16, #tpu.memory_space<vmem>>, vector<12x128xbf16>
    %cst = arith.constant dense<0.000000e+00> : vector<256x128xf32>
    %8 = tpu.matmul %6, %7, %cst {dimension_numbers = #tpu.dot_dimension_numbers<[1], [0], [0], [1], [0, 0, 1, 1], [], []>} : vector<256x12xbf16>, vector<12x128xbf16>, vector<256x128xf32> -> vector<256x128xf32>
    %c0_4 = arith.constant 0 : index
    %c0_5 = arith.constant 0 : index
    %9 = vector.load %arg3[%c0_4, %c0_5] : memref<1x128xf32, #tpu.memory_space<vmem>>, vector<1x128xf32>
    %10 = vector.broadcast %9 : vector<1x128xf32> to vector<256x128xf32>
    %11 = arith.addf %8, %10 : vector<256x128xf32>
    %cst_6 = arith.constant 0.000000e+00 : f32
    %12 = vector.broadcast %cst_6 : f32 to vector<256x128xf32>
    %13 = arith.maximumf %11, %12 : vector<256x128xf32>
    %cst_7 = arith.constant 0.000000e+00 : f32
    %14 = vector.broadcast %cst_7 : f32 to vector<16x1x128xf32>
    %15 = vector.shape_cast %13 : vector<256x128xf32> to vector<16x16x128xf32>
    %16 = tpu.concatenate %14, %15, %14 in 1 : vector<16x1x128xf32>, vector<16x16x128xf32>, vector<16x1x128xf32> -> vector<16x18x128xf32>
    %17 = vector.extract_strided_slice %16 {offsets = [0, 0, 0], sizes = [16, 16, 128], strides = [1, 1, 1]} : vector<16x18x128xf32> to vector<16x16x128xf32>
    %18 = vector.extract_strided_slice %16 {offsets = [0, 1, 0], sizes = [16, 16, 128], strides = [1, 1, 1]} : vector<16x18x128xf32> to vector<16x16x128xf32>
    %19 = vector.extract_strided_slice %16 {offsets = [0, 2, 0], sizes = [16, 16, 128], strides = [1, 1, 1]} : vector<16x18x128xf32> to vector<16x16x128xf32>
    %20 = tpu.concatenate %17, %18, %19 in 2 : vector<16x16x128xf32>, vector<16x16x128xf32>, vector<16x16x128xf32> -> vector<16x16x384xf32>
    %21 = vector.shape_cast %20 : vector<16x16x384xf32> to vector<256x384xf32>
    %22 = arith.truncf %21 : vector<256x384xf32> to vector<256x384xbf16>
    %c0_8 = arith.constant 0 : index
    %c0_9 = arith.constant 0 : index
    %23 = vector.load %arg4[%c0_8, %c0_9] : memref<384x128xbf16, #tpu.memory_space<vmem>>, vector<384x128xbf16>
    %cst_10 = arith.constant dense<0.000000e+00> : vector<256x128xf32>
    %24 = tpu.matmul %22, %23, %cst_10 {dimension_numbers = #tpu.dot_dimension_numbers<[1], [0], [0], [1], [0, 0, 1, 1], [], []>} : vector<256x384xbf16>, vector<384x128xbf16>, vector<256x128xf32> -> vector<256x128xf32>
    %c0_11 = arith.constant 0 : index
    %c0_12 = arith.constant 0 : index
    %25 = vector.load %arg5[%c0_11, %c0_12] : memref<1x128xf32, #tpu.memory_space<vmem>>, vector<1x128xf32>
    %26 = vector.broadcast %25 : vector<1x128xf32> to vector<256x128xf32>
    %27 = arith.addf %24, %26 : vector<256x128xf32>
    %cst_13 = arith.constant 0.000000e+00 : f32
    %28 = vector.broadcast %cst_13 : f32 to vector<256x128xf32>
    %29 = arith.maximumf %27, %28 : vector<256x128xf32>
    %30 = vector.shape_cast %29 : vector<256x128xf32> to vector<16x16x128xf32>
    %cst_14 = arith.constant dense<0.000000e+00> : vector<16x128xf32>
    %31 = vector.multi_reduction <add>, %30, %cst_14 [1] : vector<16x16x128xf32> to vector<16x128xf32>
    %cst_15 = arith.constant 6.250000e-02 : f32
    %32 = vector.broadcast %cst_15 : f32 to vector<16x128xf32>
    %33 = arith.mulf %31, %32 : vector<16x128xf32>
    %34 = arith.truncf %33 : vector<16x128xf32> to vector<16x128xbf16>
    %c0_16 = arith.constant 0 : index
    %c0_17 = arith.constant 0 : index
    %35 = vector.load %arg6[%c0_16, %c0_17] : memref<128x128xbf16, #tpu.memory_space<vmem>>, vector<128x128xbf16>
    %cst_18 = arith.constant dense<0.000000e+00> : vector<16x128xf32>
    %36 = tpu.matmul %34, %35, %cst_18 {dimension_numbers = #tpu.dot_dimension_numbers<[1], [0], [0], [1], [0, 0, 1, 1], [], []>} : vector<16x128xbf16>, vector<128x128xbf16>, vector<16x128xf32> -> vector<16x128xf32>
    %c0_19 = arith.constant 0 : index
    %c0_20 = arith.constant 0 : index
    %37 = vector.load %arg7[%c0_19, %c0_20] : memref<1x128xf32, #tpu.memory_space<vmem>>, vector<1x128xf32>
    %38 = vector.broadcast %37 : vector<1x128xf32> to vector<16x128xf32>
    %39 = arith.addf %36, %38 : vector<16x128xf32>
    %cst_21 = arith.constant 0.000000e+00 : f32
    %40 = vector.broadcast %cst_21 : f32 to vector<16x128xf32>
    %41 = arith.maximumf %39, %40 : vector<16x128xf32>
    %42 = arith.truncf %41 : vector<16x128xf32> to vector<16x128xbf16>
    %c0_22 = arith.constant 0 : index
    %c0_23 = arith.constant 0 : index
    %43 = vector.load %arg8[%c0_22, %c0_23] : memref<128x128xbf16, #tpu.memory_space<vmem>>, vector<128x128xbf16>
    %cst_24 = arith.constant dense<0.000000e+00> : vector<16x128xf32>
    %44 = tpu.matmul %42, %43, %cst_24 {dimension_numbers = #tpu.dot_dimension_numbers<[1], [0], [0], [1], [0, 0, 1, 1], [], []>} : vector<16x128xbf16>, vector<128x128xbf16>, vector<16x128xf32> -> vector<16x128xf32>
    %c0_25 = arith.constant 0 : index
    %c0_26 = arith.constant 0 : index
    %45 = vector.load %arg9[%c0_25, %c0_26] : memref<1x128xf32, #tpu.memory_space<vmem>>, vector<1x128xf32>
    %46 = vector.broadcast %45 : vector<1x128xf32> to vector<16x128xf32>
    %47 = arith.addf %44, %46 : vector<16x128xf32>
    %c0_27 = arith.constant 0 : index
    %c0_28 = arith.constant 0 : index
    %48 = vector.load %arg10[%c0_27, %c0_28] : memref<16x128xf32, #tpu.memory_space<vmem>>, vector<16x128xf32>
    tpu.vector_store %arg10[%c0_27, %c0_28], %47 {strides = array<i32>} : memref<16x128xf32, #tpu.memory_space<vmem>>, vector<16x128xf32>,
    return
  }
  func.func @transform_0(%arg0: i32) -> (i32, i32, i32) {
    %c0_i32 = arith.constant 0 : i32
    %c0_i32_0 = arith.constant 0 : i32
    %c0_i32_1 = arith.constant 0 : i32
    return %arg0, %c0_i32, %c0_i32_0 : i32, i32, i32
  }
  func.func @transform_1(%arg0: i32) -> (i32, i32) {
    %c0_i32 = arith.constant 0 : i32
    %c0_i32_0 = arith.constant 0 : i32
    %c0_i32_1 = arith.constant 0 : i32
    return %c0_i32, %c0_i32_0 : i32, i32
  }
  func.func @transform_2(%arg0: i32) -> (i32, i32) {
    %c0_i32 = arith.constant 0 : i32
    %c0_i32_0 = arith.constant 0 : i32
    %c0_i32_1 = arith.constant 0 : i32
    return %c0_i32, %c0_i32_0 : i32, i32
  }
  func.func @transform_3(%arg0: i32) -> (i32, i32) {
    %c0_i32 = arith.constant 0 : i32
    %c0_i32_0 = arith.constant 0 : i32
    %c0_i32_1 = arith.constant 0 : i32
    return %c0_i32, %c0_i32_0 : i32, i32
  }
  func.func @transform_4(%arg0: i32) -> (i32, i32) {
    %c0_i32 = arith.constant 0 : i32
    %c0_i32_0 = arith.constant 0 : i32
    %c0_i32_1 = arith.constant 0 : i32
    return %c0_i32, %c0_i32_0 : i32, i32
  }
  func.func @transform_5(%arg0: i32) -> (i32, i32) {
    %c0_i32 = arith.constant 0 : i32
    %c0_i32_0 = arith.constant 0 : i32
    %c0_i32_1 = arith.constant 0 : i32
    return %c0_i32, %c0_i32_0 : i32, i32
  }
  func.func @transform_6(%arg0: i32) -> (i32, i32) {
    %c0_i32 = arith.constant 0 : i32
    %c0_i32_0 = arith.constant 0 : i32
    %c0_i32_1 = arith.constant 0 : i32
    return %c0_i32, %c0_i32_0 : i32, i32
  }
  func.func @transform_7(%arg0: i32) -> (i32, i32) {
    %c0_i32 = arith.constant 0 : i32
    %c0_i32_0 = arith.constant 0 : i32
    %c0_i32_1 = arith.constant 0 : i32
    return %c0_i32, %c0_i32_0 : i32, i32
  }
  func.func @transform_8(%arg0: i32) -> (i32, i32) {
    %c0_i32 = arith.constant 0 : i32
    %c0_i32_0 = arith.constant 0 : i32
    %c0_i32_1 = arith.constant 0 : i32
    return %c0_i32, %c0_i32_0 : i32, i32
  }
  func.func @transform_9(%arg0: i32) -> (i32, i32) {
    %c0_i32 = arith.constant 0 : i32
    %c0_i32_0 = arith.constant 0 : i32
    return %arg0, %c0_i32 : i32, i32
  }
}

</mosaic_0001>

<llo_original>
// kernel: tpu_custom_call.1
$region0: #{tpu_custom_call.1}
  #allocation0 [shape = 'u32[]', space=smem, size = 0x4, offset = 0x4, fixed_abs, tag = 'smem constant byte address 0x4 - core index']
  #allocation1 [shape = 'u32[144,128]{1,0:T(1,128)}', space=vmem, size = 0x12000, scoped, tag = 'internal scratch']
  %s0 = inlined_call_operand.vmem [shape: f32[32,18,4], index: 0, kind: input, shape index: {}]
  %s1 = inlined_call_operand.vmem [shape: bf16[12,128], index: 1, kind: input, shape index: {}]
  %s2 = inlined_call_operand.vmem [shape: f32[1,128], index: 2, kind: input, shape index: {}]
  %s3 = inlined_call_operand.vmem [shape: bf16[384,128], index: 3, kind: input, shape index: {}]
  %s4 = inlined_call_operand.vmem [shape: f32[1,128], index: 4, kind: input, shape index: {}]
  %s5 = inlined_call_operand.vmem [shape: bf16[128,128], index: 5, kind: input, shape index: {}]
  %s6 = inlined_call_operand.vmem [shape: f32[1,128], index: 6, kind: input, shape index: {}]
  %s7 = inlined_call_operand.vmem [shape: bf16[128,128], index: 7, kind: input, shape index: {}]
  %s8 = inlined_call_operand.vmem [shape: f32[1,128], index: 8, kind: input, shape index: {}]
  %s9 = inlined_call_operand.hbm [shape: f32[32,128], index: 9, kind: output, shape index: {}]
  %s10 = sld [smem:[#allocation0]]
  $region69: #{tpu_custom_call.1} parent=0
    _
  %s12 = ssub.s32 1, %s10
  %s13 = scalar_select 0, %s12, %s10
  $region1: #{tpu_custom_call.1} parent=0
    #allocation2 [shape = 'u8[16384]{0}', space=vmem, size = 0x4000, scoped, tag = 'output window, operand 0']
    #allocation3 [shape = 's32[2]{0}', space=sflag, size = 0x8, scoped, tag = 'scoped memory for tpu_custom_call.1']
    %14 = vsyncpa [#allocation3], 0
    %s15 = scalar_lea.sflag [#allocation3], 1
    %16 = vsyncpa %s15, 0
    loop: start=0, step=1, limit=4
    $region2: #{tpu_custom_call.1} parent=1 // loop_pre_header
      _
    $region3: #{tpu_custom_call.1} parent=1 // loop_header
      %s18 = sphi 0, %s22
      %p19 = scmp.ge.s32.totalorder %s18, 4
      %s28 = sphi 0, %s30
      %s31 = sphi 0, %s28
      %s32 = sphi 0, %s31
      %s48 = sphi 0, %s32
      %s52 = sphi 0, %s52
      %s54 = sphi 0, %s52
      %s55 = sphi 0, %s54
      %s69 = sphi 0, %s55
      %s73 = sphi 0, %s73
      %s75 = sphi 0, %s73
      %s76 = sphi 0, %s75
      %s90 = sphi 0, %s76
      %s94 = sphi 0, %s94
      %s96 = sphi 0, %s94
      %s97 = sphi 0, %s96
      %s111 = sphi 0, %s97
      %s115 = sphi 0, %s115
      %s117 = sphi 0, %s115
      %s118 = sphi 0, %s117
      %s132 = sphi 0, %s118
      %s136 = sphi 0, %s136
      %s138 = sphi 0, %s136
      %s139 = sphi 0, %s138
      %s153 = sphi 0, %s139
      %s157 = sphi 0, %s157
      %s159 = sphi 0, %s157
      %s160 = sphi 0, %s159
      %s174 = sphi 0, %s160
      %s178 = sphi 0, %s178
      %s180 = sphi 0, %s178
      %s181 = sphi 0, %s180
      %s195 = sphi 0, %s181
      %s199 = sphi 0, %s199
      %s201 = sphi 0, %s199
      %s202 = sphi 0, %s201
      %s216 = sphi 0, %s202
      %s222 = sphi 0, %s224
      %s225 = sphi 0, %s222
      %s226 = sphi 0, %s225
      %s242 = sphi 0, %s226
    $region4: #{tpu_custom_call.1} parent=1 // loop_header_branch
      %21 = sbr.rel (%p19) target = $region8
    $region5: #{tpu_custom_call.1} parent=1 // loop_body
      %s23 = ssub.s32 %s18, 1
      %s24 = ssub.s32 %s18, 2
      %s25 = sadd.s32 %s18, 1
      %s26 = ssub.s32 %s18, %s25
      %p27 = scmp.eq.s32.totalorder %s26, 0
      %s29 = sadd.s32 %s28, 1
      %s30 = scalar_select %p27, %s28, %s29
      %p33 = pneg %p27
      %p34 = scmp.eq.s32.totalorder %s18, 1
      %p35 = por %p33, %p34
      %p36 = scmp.ne.s32.totalorder %s28, %s31
      %p37 = scmp.eq.s32.totalorder %s18, 0
      %p38 = por %p36, %p37
      %p39 = scmp.ne.s32.totalorder %s28, %s31
      %p40 = scmp.eq.s32.totalorder %s23, 1
      %p41 = por %p39, %p40
      %p42 = scmp.ne.s32.totalorder %s31, %s32
      %p43 = scmp.eq.s32.totalorder %s23, 0
      %p44 = por %p42, %p43
      %p45 = scmp.ne.s32.totalorder %s31, %s32
      %p46 = scmp.eq.s32.totalorder %s24, 1
      %p47 = por %p45, %p46
      %p49 = scmp.ne.s32.totalorder %s32, %s48
      %p50 = scmp.eq.s32.totalorder %s24, 0
      %p51 = por %p49, %p50
      %s53 = sadd.s32 %s52, 1
      %p56 = scmp.eq.s32.totalorder %s18, 1
      %p57 = scmp.ne.s32.totalorder %s52, %s54
      %p58 = scmp.eq.s32.totalorder %s18, 0
      %p59 = por %p57, %p58
      %p60 = scmp.ne.s32.totalorder %s52, %s54
      %p61 = scmp.eq.s32.totalorder %s23, 1
      %p62 = por %p60, %p61
      %p63 = scmp.ne.s32.totalorder %s54, %s55
      %p64 = scmp.eq.s32.totalorder %s23, 0
      %p65 = por %p63, %p64
      %p66 = scmp.ne.s32.totalorder %s54, %s55
      %p67 = scmp.eq.s32.totalorder %s24, 1
      %p68 = por %p66, %p67
      %p70 = scmp.ne.s32.totalorder %s55, %s69
      %p71 = scmp.eq.s32.totalorder %s24, 0
      %p72 = por %p70, %p71
      %s74 = sadd.s32 %s73, 1
      %p77 = scmp.eq.s32.totalorder %s18, 1
      %p78 = scmp.ne.s32.totalorder %s73, %s75
      %p79 = scmp.eq.s32.totalorder %s18, 0
      %p80 = por %p78, %p79
      %p81 = scmp.ne.s32.totalorder %s73, %s75
      %p82 = scmp.eq.s32.totalorder %s23, 1
      %p83 = por %p81, %p82
      %p84 = scmp.ne.s32.totalorder %s75, %s76
      %p85 = scmp.eq.s32.totalorder %s23, 0
      %p86 = por %p84, %p85
      %p87 = scmp.ne.s32.totalorder %s75, %s76
      %p88 = scmp.eq.s32.totalorder %s24, 1
      %p89 = por %p87, %p88
      %p91 = scmp.ne.s32.totalorder %s76, %s90
      %p92 = scmp.eq.s32.totalorder %s24, 0
      %p93 = por %p91, %p92
      %s95 = sadd.s32 %s94, 1
      %p98 = scmp.eq.s32.totalorder %s18, 1
      %p99 = scmp.ne.s32.totalorder %s94, %s96
      %p100 = scmp.eq.s32.totalorder %s18, 0
      %p101 = por %p99, %p100
      %p102 = scmp.ne.s32.totalorder %s94, %s96
      %p103 = scmp.eq.s32.totalorder %s23, 1
      %p104 = por %p102, %p103
      %p105 = scmp.ne.s32.totalorder %s96, %s97
      %p106 = scmp.eq.s32.totalorder %s23, 0
      %p107 = por %p105, %p106
      %p108 = scmp.ne.s32.totalorder %s96, %s97
      %p109 = scmp.eq.s32.totalorder %s24, 1
      %p110 = por %p108, %p109
      %p112 = scmp.ne.s32.totalorder %s97, %s111
      %p113 = scmp.eq.s32.totalorder %s24, 0
      %p114 = por %p112, %p113
      %s116 = sadd.s32 %s115, 1
      %p119 = scmp.eq.s32.totalorder %s18, 1
      %p120 = scmp.ne.s32.totalorder %s115, %s117
      %p121 = scmp.eq.s32.totalorder %s18, 0
      %p122 = por %p120, %p121
      %p123 = scmp.ne.s32.totalorder %s115, %s117
      %p124 = scmp.eq.s32.totalorder %s23, 1
      %p125 = por %p123, %p124
      %p126 = scmp.ne.s32.totalorder %s117, %s118
      %p127 = scmp.eq.s32.totalorder %s23, 0
      %p128 = por %p126, %p127
      %p129 = scmp.ne.s32.totalorder %s117, %s118
      %p130 = scmp.eq.s32.totalorder %s24, 1
      %p131 = por %p129, %p130
      %p133 = scmp.ne.s32.totalorder %s118, %s132
      %p134 = scmp.eq.s32.totalorder %s24, 0
      %p135 = por %p133, %p134
      %s137 = sadd.s32 %s136, 1
      %p140 = scmp.eq.s32.totalorder %s18, 1
      %p141 = scmp.ne.s32.totalorder %s136, %s138
      %p142 = scmp.eq.s32.totalorder %s18, 0
      %p143 = por %p141, %p142
      %p144 = scmp.ne.s32.totalorder %s136, %s138
      %p145 = scmp.eq.s32.totalorder %s23, 1
      %p146 = por %p144, %p145
      %p147 = scmp.ne.s32.totalorder %s138, %s139
      %p148 = scmp.eq.s32.totalorder %s23, 0
      %p149 = por %p147, %p148
      %p150 = scmp.ne.s32.totalorder %s138, %s139
      %p151 = scmp.eq.s32.totalorder %s24, 1
      %p152 = por %p150, %p151
      %p154 = scmp.ne.s32.totalorder %s139, %s153
      %p155 = scmp.eq.s32.totalorder %s24, 0
      %p156 = por %p154, %p155
      %s158 = sadd.s32 %s157, 1
      %p161 = scmp.eq.s32.totalorder %s18, 1
      %p162 = scmp.ne.s32.totalorder %s157, %s159
      %p163 = scmp.eq.s32.totalorder %s18, 0
      %p164 = por %p162, %p163
      %p165 = scmp.ne.s32.totalorder %s157, %s159
      %p166 = scmp.eq.s32.totalorder %s23, 1
      %p167 = por %p165, %p166
      %p168 = scmp.ne.s32.totalorder %s159, %s160
      %p169 = scmp.eq.s32.totalorder %s23, 0
      %p170 = por %p168, %p169
      %p171 = scmp.ne.s32.totalorder %s159, %s160
      %p172 = scmp.eq.s32.totalorder %s24, 1
      %p173 = por %p171, %p172
      %p175 = scmp.ne.s32.totalorder %s160, %s174
      %p176 = scmp.eq.s32.totalorder %s24, 0
      %p177 = por %p175, %p176
      %s179 = sadd.s32 %s178, 1
      %p182 = scmp.eq.s32.totalorder %s18, 1
      %p183 = scmp.ne.s32.totalorder %s178, %s180
      %p184 = scmp.eq.s32.totalorder %s18, 0
      %p185 = por %p183, %p184
      %p186 = scmp.ne.s32.totalorder %s178, %s180
      %p187 = scmp.eq.s32.totalorder %s23, 1
      %p188 = por %p186, %p187
      %p189 = scmp.ne.s32.totalorder %s180, %s181
      %p190 = scmp.eq.s32.totalorder %s23, 0
      %p191 = por %p189, %p190
      %p192 = scmp.ne.s32.totalorder %s180, %s181
      %p193 = scmp.eq.s32.totalorder %s24, 1
      %p194 = por %p192, %p193
      %p196 = scmp.ne.s32.totalorder %s181, %s195
      %p197 = scmp.eq.s32.totalorder %s24, 0
      %p198 = por %p196, %p197
      %s200 = sadd.s32 %s199, 1
      %p203 = scmp.eq.s32.totalorder %s18, 1
      %p204 = scmp.ne.s32.totalorder %s199, %s201
      %p205 = scmp.eq.s32.totalorder %s18, 0
      %p206 = por %p204, %p205
      %p207 = scmp.ne.s32.totalorder %s199, %s201
      %p208 = scmp.eq.s32.totalorder %s23, 1
      %p209 = por %p207, %p208
      %p210 = scmp.ne.s32.totalorder %s201, %s202
      %p211 = scmp.eq.s32.totalorder %s23, 0
      %p212 = por %p210, %p211
      %p213 = scmp.ne.s32.totalorder %s201, %s202
      %p214 = scmp.eq.s32.totalorder %s24, 1
      %p215 = por %p213, %p214
      %p217 = scmp.ne.s32.totalorder %s202, %s216
      %p218 = scmp.eq.s32.totalorder %s24, 0
      %p219 = por %p217, %p218
      %s220 = ssub.s32 %s18, %s25
      %p221 = scmp.eq.s32.totalorder %s220, 0
      %s223 = sadd.s32 %s222, 1
      %s224 = scalar_select %p221, %s222, %s223
      %p227 = pneg %p221
      %p228 = scmp.eq.s32.totalorder %s18, 1
      %p229 = por %p227, %p228
      %p230 = scmp.ne.s32.totalorder %s222, %s225
      %p231 = scmp.eq.s32.totalorder %s18, 0
      %p232 = por %p230, %p231
      %p233 = scmp.ne.s32.totalorder %s222, %s225
      %p234 = scmp.eq.s32.totalorder %s23, 1
      %p235 = por %p233, %p234
      %p236 = scmp.ne.s32.totalorder %s225, %s226
      %p237 = scmp.eq.s32.totalorder %s23, 0
      %p238 = por %p236, %p237
      %p239 = scmp.ne.s32.totalorder %s225, %s226
      %p240 = scmp.eq.s32.totalorder %s24, 1
      %p241 = por %p239, %p240
      %p243 = scmp.ne.s32.totalorder %s226, %s242
      %p244 = scmp.eq.s32.totalorder %s24, 0
      %p245 = por %p243, %p244
      %p246 = scmp.le.s32.totalorder 1, %s18
      %p247 = scmp.lt.s32.totalorder %s18, 3
      %p248 = pnand %p246, %p247
      %p249 = pneg %p248
      // Predicated region
      $region9: #{tpu_custom_call.1} parent=5 // pred_check
        _
      $region10: #{tpu_custom_call.1} parent=5 // pred_check_branch
        %251 = sbr.rel (%p248) target = $region12
      $region11: #{tpu_custom_call.1} parent=5 // pred_region
        %s252 = ssub.s32 %s18, 1
        // Predicated region
        $region13: #{tpu_custom_call.1} parent=11 // pred_check
          %p253 = pneg %p65
        $region14: #{tpu_custom_call.1} parent=11 // pred_check_branch
          %255 = sbr.rel (%p253) target = $region16
        $region15: #{tpu_custom_call.1} parent=11 // pred_region
          _
        $region16: #{tpu_custom_call.1} parent=11 // pred_fallthru
          _
        // Predicated region
        $region17: #{tpu_custom_call.1} parent=11 // pred_check
          %p256 = pneg %p86
        $region18: #{tpu_custom_call.1} parent=11 // pred_check_branch
          %258 = sbr.rel (%p256) target = $region20
        $region19: #{tpu_custom_call.1} parent=11 // pred_region
          _
        $region20: #{tpu_custom_call.1} parent=11 // pred_fallthru
          _
        // Predicated region
        $region21: #{tpu_custom_call.1} parent=11 // pred_check
          %p259 = pneg %p107
        $region22: #{tpu_custom_call.1} parent=11 // pred_check_branch
          %261 = sbr.rel (%p259) target = $region24
        $region23: #{tpu_custom_call.1} parent=11 // pred_region
          _
        $region24: #{tpu_custom_call.1} parent=11 // pred_fallthru
          _
        // Predicated region
        $region25: #{tpu_custom_call.1} parent=11 // pred_check
          %p262 = pneg %p128
        $region26: #{tpu_custom_call.1} parent=11 // pred_check_branch
          %264 = sbr.rel (%p262) target = $region28
        $region27: #{tpu_custom_call.1} parent=11 // pred_region
          _
        $region28: #{tpu_custom_call.1} parent=11 // pred_fallthru
          _
        // Predicated region
        $region29: #{tpu_custom_call.1} parent=11 // pred_check
          %p265 = pneg %p149
        $region30: #{tpu_custom_call.1} parent=11 // pred_check_branch
          %267 = sbr.rel (%p265) target = $region32
        $region31: #{tpu_custom_call.1} parent=11 // pred_region
          _
        $region32: #{tpu_custom_call.1} parent=11 // pred_fallthru
          _
        // Predicated region
        $region33: #{tpu_custom_call.1} parent=11 // pred_check
          %p268 = pneg %p170
        $region34: #{tpu_custom_call.1} parent=11 // pred_check_branch
          %270 = sbr.rel (%p268) target = $region36
        $region35: #{tpu_custom_call.1} parent=11 // pred_region
          _
        $region36: #{tpu_custom_call.1} parent=11 // pred_fallthru
          _
        // Predicated region
        $region37: #{tpu_custom_call.1} parent=11 // pred_check
          %p271 = pneg %p191
        $region38: #{tpu_custom_call.1} parent=11 // pred_check_branch
          %273 = sbr.rel (%p271) target = $region40
        $region39: #{tpu_custom_call.1} parent=11 // pred_region
          _
        $region40: #{tpu_custom_call.1} parent=11 // pred_fallthru
          _
        // Predicated region
        $region41: #{tpu_custom_call.1} parent=11 // pred_check
          %p274 = pneg %p212
        $region42: #{tpu_custom_call.1} parent=11 // pred_check_branch
          %276 = sbr.rel (%p274) target = $region44
        $region43: #{tpu_custom_call.1} parent=11 // pred_region
          _
        $region44: #{tpu_custom_call.1} parent=11 // pred_fallthru
          _
      $region12: #{tpu_custom_call.1} parent=5 // pred_fallthru
        _
      %p277 = scmp.lt.s32.totalorder %s18, 2
      // Predicated region
      $region45: #{tpu_custom_call.1} parent=5 // pred_check
        %p278 = pneg %p277
      $region46: #{tpu_custom_call.1} parent=5 // pred_check_branch
        %280 = sbr.rel (%p278) target = $region48
      $region47: #{tpu_custom_call.1} parent=5 // pred_region
        // Predicated region
        $region49: #{tpu_custom_call.1} parent=47 // pred_check
          %p281 = pneg %p38
        $region50: #{tpu_custom_call.1} parent=47 // pred_check_branch
          %283 = sbr.rel (%p281) target = $region52
        $region51: #{tpu_custom_call.1} parent=47 // pred_region
          %s284 = smul.u32 16, %s18
          %p285 = scmp.lt.s32.totalorder %s284, 31
          %s286 = scalar_select %p285, %s284, 31
          %s287 = smul.addr %s286, 3
          %s288 = smul.addr %s287, 8
          %s289 = scalar_lea.vmem %s0, %s288
          %s290 = smul.u32 16, %s18
        $region52: #{tpu_custom_call.1} parent=47 // pred_fallthru
          _
      $region48: #{tpu_custom_call.1} parent=5 // pred_fallthru
        _
      %p291 = scmp.le.s32.totalorder 1, %s18
      %p292 = scmp.lt.s32.totalorder %s18, 3
      %p293 = pnand %p291, %p292
      %p294 = pneg %p293
      // Predicated region
      $region53: #{tpu_custom_call.1} parent=5 // pred_check
        _
      $region54: #{tpu_custom_call.1} parent=5 // pred_check_branch
        %296 = sbr.rel (%p293) target = $region56
      $region55: #{tpu_custom_call.1} parent=5 // pred_region
        %s297 = ssub.s32 %s18, 1
        %s298 = smul.u32 16, %s23
        %p299 = scmp.lt.s32.totalorder %s298, 31
        %s300 = scalar_select %p299, %s298, 31
        %s301 = smul.addr %s300, 3
        %s302 = smul.addr %s301, 8
        %s303 = scalar_lea.vmem %s0, %s302
        %p304 = pneg %p44
        %p305 = pneg %p41
        %p306 = pneg %p65
        %p307 = pneg %p62
        %p308 = pneg %p86
        %p309 = pneg %p83
        %p310 = pneg %p107
        %p311 = pneg %p104
        %p312 = pneg %p128
        %p313 = pneg %p125
        %p314 = pneg %p149
        %p315 = pneg %p146
        %p316 = pneg %p170
        %p317 = pneg %p167
        %p318 = pneg %p191
        %p319 = pneg %p188
        %p320 = pneg %p212
        %p321 = pneg %p209
        %p322 = pneg %p238
        %p323 = pneg %p235
        %s324 = sand.u32 %s225, 1
        %s325 = scalar_lea.sflag [#allocation3], %s324
        %s326 = sand.u32 %s225, 1
        %s327 = smul.addr %s326, 16
        %s328 = scalar_lea.vmem [#allocation2], %s327
        %s329 = smul.u32 16, %s23
        %p330 = scmp.lt.s32.totalorder %s329, 31
        %s331 = scalar_select %p330, %s329, 31
        %s332 = smul.addr %s331, 3
        %s333 = smul.addr %s332, 8
        %s334 = scalar_lea.vmem %s0, %s333
        %s335 = smul.u32 16, %s23
        %s336 = smul.u32 2, %s23
        %v338 = vld [vmem:[%s334] sm:$0xff]
        %v339 = vld [vmem:[%s334 + $0x8] sm:$0xff]
        %v340 = vld [vmem:[%s334 + $0x10] sm:$0x3]
        %v341 = vld [vmem:[%s334 + $0x18] sm:$0xff]
        %v342 = vld [vmem:[%s334 + $0x20] sm:$0xff]
        %v343 = vld [vmem:[%s334 + $0x28] sm:$0x3]
        %v344 = vld [vmem:[%s334 + $0x30] sm:$0xff]
        %v345 = vld [vmem:[%s334 + $0x38] sm:$0xff]
        %v346 = vld [vmem:[%s334 + $0x40] sm:$0x3]
        %v347 = vld [vmem:[%s334 + $0x48] sm:$0xff]
        %v348 = vld [vmem:[%s334 + $0x50] sm:$0xff]
        %v349 = vld [vmem:[%s334 + $0x58] sm:$0x3]
        %v350 = vld [vmem:[%s334 + $0x60] sm:$0xff]
        %v351 = vld [vmem:[%s334 + $0x68] sm:$0xff]
        %v352 = vld [vmem:[%s334 + $0x70] sm:$0x3]
        %v353 = vld [vmem:[%s334 + $0x78] sm:$0xff]
        %v354 = vld [vmem:[%s334 + $0x80] sm:$0xff]
        %v355 = vld [vmem:[%s334 + $0x88] sm:$0x3]
        %v356 = vld [vmem:[%s334 + $0x90] sm:$0xff]
        %v357 = vld [vmem:[%s334 + $0x98] sm:$0xff]
        %v358 = vld [vmem:[%s334 + $0xa0] sm:$0x3]
        %v359 = vld [vmem:[%s334 + $0xa8] sm:$0xff]
        %v360 = vld [vmem:[%s334 + $0xb0] sm:$0xff]
        %v361 = vld [vmem:[%s334 + $0xb8] sm:$0x3]
        %v362 = vld [vmem:[%s334 + $0xc0] sm:$0xff]
        %v363 = vld [vmem:[%s334 + $0xc8] sm:$0xff]
        %v364 = vld [vmem:[%s334 + $0xd0] sm:$0x3]
        %v365 = vld [vmem:[%s334 + $0xd8] sm:$0xff]
        %v366 = vld [vmem:[%s334 + $0xe0] sm:$0xff]
        %v367 = vld [vmem:[%s334 + $0xe8] sm:$0x3]
        %v368 = vld [vmem:[%s334 + $0xf0] sm:$0xff]
        %v369 = vld [vmem:[%s334 + $0xf8] sm:$0xff]
        %v370 = vld [vmem:[%s334 + $0x100] sm:$0x3]
        %v371 = vld [vmem:[%s334 + $0x108] sm:$0xff]
        %v372 = vld [vmem:[%s334 + $0x110] sm:$0xff]
        %v373 = vld [vmem:[%s334 + $0x118] sm:$0x3]
        %v374 = vld [vmem:[%s334 + $0x120] sm:$0xff]
        %v375 = vld [vmem:[%s334 + $0x128] sm:$0xff]
        %v376 = vld [vmem:[%s334 + $0x130] sm:$0x3]
        %v377 = vld [vmem:[%s334 + $0x138] sm:$0xff]
        %v378 = vld [vmem:[%s334 + $0x140] sm:$0xff]
        %v379 = vld [vmem:[%s334 + $0x148] sm:$0x3]
        %v380 = vld [vmem:[%s334 + $0x150] sm:$0xff]
        %v381 = vld [vmem:[%s334 + $0x158] sm:$0xff]
        %v382 = vld [vmem:[%s334 + $0x160] sm:$0x3]
        %v383 = vld [vmem:[%s334 + $0x168] sm:$0xff]
        %v384 = vld [vmem:[%s334 + $0x170] sm:$0xff]
        %v385 = vld [vmem:[%s334 + $0x178] sm:$0x3]
        %vm434 = vcmask 1046528
        %v435 = vrot.slane %v338, 1
        %v436 = vrot.slane %v339, 1
        %v437 = vsel %vm434, %v435, %v436
        %v438 = vrot.slane %v340, 1
        %v439 = vsel %vm434, %v436, %v438
        %v440 = vrot.slane %v341, 1
        %v441 = vrot.slane %v342, 1
        %v442 = vsel %vm434, %v440, %v441
        %v443 = vrot.slane %v343, 1
        %v444 = vsel %vm434, %v441, %v443
        %v445 = vrot.slane %v344, 1
        %v446 = vrot.slane %v345, 1
        %v447 = vsel %vm434, %v445, %v446
        %v448 = vrot.slane %v346, 1
        %v449 = vsel %vm434, %v446, %v448
        %v450 = vrot.slane %v347, 1
        %v451 = vrot.slane %v348, 1
        %v452 = vsel %vm434, %v450, %v451
        %v453 = vrot.slane %v349, 1
        %v454 = vsel %vm434, %v451, %v453
        %v455 = vrot.slane %v350, 1
        %v456 = vrot.slane %v351, 1
        %v457 = vsel %vm434, %v455, %v456
        %v458 = vrot.slane %v352, 1
        %v459 = vsel %vm434, %v456, %v458
        %v460 = vrot.slane %v353, 1
        %v461 = vrot.slane %v354, 1
        %v462 = vsel %vm434, %v460, %v461
        %v463 = vrot.slane %v355, 1
        %v464 = vsel %vm434, %v461, %v463
        %v465 = vrot.slane %v356, 1
        %v466 = vrot.slane %v357, 1
        %v467 = vsel %vm434, %v465, %v466
        %v468 = vrot.slane %v358, 1
        %v469 = vsel %vm434, %v466, %v468
        %v470 = vrot.slane %v359, 1
        %v471 = vrot.slane %v360, 1
        %v472 = vsel %vm434, %v470, %v471
        %v473 = vrot.slane %v361, 1
        %v474 = vsel %vm434, %v471, %v473
        %v475 = vrot.slane %v362, 1
        %v476 = vrot.slane %v363, 1
        %v477 = vsel %vm434, %v475, %v476
        %v478 = vrot.slane %v364, 1
        %v479 = vsel %vm434, %v476, %v478
        %v480 = vrot.slane %v365, 1
        %v481 = vrot.slane %v366, 1
        %v482 = vsel %vm434, %v480, %v481
        %v483 = vrot.slane %v367, 1
        %v484 = vsel %vm434, %v481, %v483
        %v485 = vrot.slane %v368, 1
        %v486 = vrot.slane %v369, 1
        %v487 = vsel %vm434, %v485, %v486
        %v488 = vrot.slane %v370, 1
        %v489 = vsel %vm434, %v486, %v488
        %v490 = vrot.slane %v371, 1
        %v491 = vrot.slane %v372, 1
        %v492 = vsel %vm434, %v490, %v491
        %v493 = vrot.slane %v373, 1
        %v494 = vsel %vm434, %v491, %v493
        %v495 = vrot.slane %v374, 1
        %v496 = vrot.slane %v375, 1
        %v497 = vsel %vm434, %v495, %v496
        %v498 = vrot.slane %v376, 1
        %v499 = vsel %vm434, %v496, %v498
        %v500 = vrot.slane %v377, 1
        %v501 = vrot.slane %v378, 1
        %v502 = vsel %vm434, %v500, %v501
        %v503 = vrot.slane %v379, 1
        %v504 = vsel %vm434, %v501, %v503
        %v505 = vrot.slane %v380, 1
        %v506 = vrot.slane %v381, 1
        %v507 = vsel %vm434, %v505, %v506
        %v508 = vrot.slane %v382, 1
        %v509 = vsel %vm434, %v506, %v508
        %v510 = vrot.slane %v383, 1
        %v511 = vrot.slane %v384, 1
        %v512 = vsel %vm434, %v510, %v511
        %v513 = vrot.slane %v385, 1
        %v514 = vsel %vm434, %v511, %v513
        %515 = vrot.lane.b32.xlu0 %v437, 4
        %v516 = vpop.permute.xlu0 %515
        %517 = vrot.lane.b32.xlu0 %v439, 4
        %v518 = vpop.permute.xlu0 %517
        %519 = vrot.lane.b32.xlu0 %v442, 4
        %v520 = vpop.permute.xlu0 %519
        %521 = vrot.lane.b32.xlu0 %v444, 4
        %v522 = vpop.permute.xlu0 %521
        %523 = vrot.lane.b32.xlu0 %v447, 4
        %v524 = vpop.permute.xlu0 %523
        %525 = vrot.lane.b32.xlu0 %v449, 4
        %v526 = vpop.permute.xlu0 %525
        %527 = vrot.lane.b32.xlu0 %v452, 4
        %v528 = vpop.permute.xlu0 %527
        %529 = vrot.lane.b32.xlu0 %v454, 4
        %v530 = vpop.permute.xlu0 %529
        %531 = vrot.lane.b32.xlu0 %v457, 4
        %v532 = vpop.permute.xlu0 %531
        %533 = vrot.lane.b32.xlu0 %v459, 4
        %v534 = vpop.permute.xlu0 %533
        %535 = vrot.lane.b32.xlu0 %v462, 4
        %v536 = vpop.permute.xlu0 %535
        %537 = vrot.lane.b32.xlu0 %v464, 4
        %v538 = vpop.permute.xlu0 %537
        %539 = vrot.lane.b32.xlu0 %v467, 4
        %v540 = vpop.permute.xlu0 %539
        %541 = vrot.lane.b32.xlu0 %v469, 4
        %v542 = vpop.permute.xlu0 %541
        %543 = vrot.lane.b32.xlu0 %v472, 4
        %v544 = vpop.permute.xlu0 %543
        %545 = vrot.lane.b32.xlu0 %v474, 4
        %v546 = vpop.permute.xlu0 %545
        %547 = vrot.lane.b32.xlu0 %v477, 4
        %v548 = vpop.permute.xlu0 %547
        %549 = vrot.lane.b32.xlu0 %v479, 4
        %v550 = vpop.permute.xlu0 %549
        %551 = vrot.lane.b32.xlu0 %v482, 4
        %v552 = vpop.permute.xlu0 %551
        %553 = vrot.lane.b32.xlu0 %v484, 4
        %v554 = vpop.permute.xlu0 %553
        %555 = vrot.lane.b32.xlu0 %v487, 4
        %v556 = vpop.permute.xlu0 %555
        %557 = vrot.lane.b32.xlu0 %v489, 4
        %v558 = vpop.permute.xlu0 %557
        %559 = vrot.lane.b32.xlu0 %v492, 4
        %v560 = vpop.permute.xlu0 %559
        %561 = vrot.lane.b32.xlu0 %v494, 4
        %v562 = vpop.permute.xlu0 %561
        %563 = vrot.lane.b32.xlu0 %v497, 4
        %v564 = vpop.permute.xlu0 %563
        %565 = vrot.lane.b32.xlu0 %v499, 4
        %v566 = vpop.permute.xlu0 %565
        %567 = vrot.lane.b32.xlu0 %v502, 4
        %v568 = vpop.permute.xlu0 %567
        %569 = vrot.lane.b32.xlu0 %v504, 4
        %v570 = vpop.permute.xlu0 %569
        %571 = vrot.lane.b32.xlu0 %v507, 4
        %v572 = vpop.permute.xlu0 %571
        %573 = vrot.lane.b32.xlu0 %v509, 4
        %v574 = vpop.permute.xlu0 %573
        %575 = vrot.lane.b32.xlu0 %v512, 4
        %v576 = vpop.permute.xlu0 %575
        %577 = vrot.lane.b32.xlu0 %v514, 4
        %v578 = vpop.permute.xlu0 %577
        %vm611 = vcmask 1045504
        %v612 = vrot.slane %v338, 2
        %v613 = vrot.slane %v339, 2
        %v614 = vsel %vm611, %v612, %v613
        %v615 = vrot.slane %v340, 2
        %v616 = vsel %vm611, %v613, %v615
        %v617 = vrot.slane %v341, 2
        %v618 = vrot.slane %v342, 2
        %v619 = vsel %vm611, %v617, %v618
        %v620 = vrot.slane %v343, 2
        %v621 = vsel %vm611, %v618, %v620
        %v622 = vrot.slane %v344, 2
        %v623 = vrot.slane %v345, 2
        %v624 = vsel %vm611, %v622, %v623
        %v625 = vrot.slane %v346, 2
        %v626 = vsel %vm611, %v623, %v625
        %v627 = vrot.slane %v347, 2
        %v628 = vrot.slane %v348, 2
        %v629 = vsel %vm611, %v627, %v628
        %v630 = vrot.slane %v349, 2
        %v631 = vsel %vm611, %v628, %v630
        %v632 = vrot.slane %v350, 2
        %v633 = vrot.slane %v351, 2
        %v634 = vsel %vm611, %v632, %v633
        %v635 = vrot.slane %v352, 2
        %v636 = vsel %vm611, %v633, %v635
        %v637 = vrot.slane %v353, 2
        %v638 = vrot.slane %v354, 2
        %v639 = vsel %vm611, %v637, %v638
        %v640 = vrot.slane %v355, 2
        %v641 = vsel %vm611, %v638, %v640
        %v642 = vrot.slane %v356, 2
        %v643 = vrot.slane %v357, 2
        %v644 = vsel %vm611, %v642, %v643
        %v645 = vrot.slane %v358, 2
        %v646 = vsel %vm611, %v643, %v645
        %v647 = vrot.slane %v359, 2
        %v648 = vrot.slane %v360, 2
        %v649 = vsel %vm611, %v647, %v648
        %v650 = vrot.slane %v361, 2
        %v651 = vsel %vm611, %v648, %v650
        %v652 = vrot.slane %v362, 2
        %v653 = vrot.slane %v363, 2
        %v654 = vsel %vm611, %v652, %v653
        %v655 = vrot.slane %v364, 2
        %v656 = vsel %vm611, %v653, %v655
        %v657 = vrot.slane %v365, 2
        %v658 = vrot.slane %v366, 2
        %v659 = vsel %vm611, %v657, %v658
        %v660 = vrot.slane %v367, 2
        %v661 = vsel %vm611, %v658, %v660
        %v662 = vrot.slane %v368, 2
        %v663 = vrot.slane %v369, 2
        %v664 = vsel %vm611, %v662, %v663
        %v665 = vrot.slane %v370, 2
        %v666 = vsel %vm611, %v663, %v665
        %v667 = vrot.slane %v371, 2
        %v668 = vrot.slane %v372, 2
        %v669 = vsel %vm611, %v667, %v668
        %v670 = vrot.slane %v373, 2
        %v671 = vsel %vm611, %v668, %v670
        %v672 = vrot.slane %v374, 2
        %v673 = vrot.slane %v375, 2
        %v674 = vsel %vm611, %v672, %v673
        %v675 = vrot.slane %v376, 2
        %v676 = vsel %vm611, %v673, %v675
        %v677 = vrot.slane %v377, 2
        %v678 = vrot.slane %v378, 2
        %v679 = vsel %vm611, %v677, %v678
        %v680 = vrot.slane %v379, 2
        %v681 = vsel %vm611, %v678, %v680
        %v682 = vrot.slane %v380, 2
        %v683 = vrot.slane %v381, 2
        %v684 = vsel %vm611, %v682, %v683
        %v685 = vrot.slane %v382, 2
        %v686 = vsel %vm611, %v683, %v685
        %v687 = vrot.slane %v383, 2
        %v688 = vrot.slane %v384, 2
        %v689 = vsel %vm611, %v687, %v688
        %v690 = vrot.slane %v385, 2
        %v691 = vsel %vm611, %v688, %v690
        %692 = vrot.lane.b32.xlu0 %v614, 8
        %v693 = vpop.permute.xlu0 %692
        %694 = vrot.lane.b32.xlu0 %v616, 8
        %v695 = vpop.permute.xlu0 %694
        %696 = vrot.lane.b32.xlu0 %v619, 8
        %v697 = vpop.permute.xlu0 %696
        %698 = vrot.lane.b32.xlu0 %v621, 8
        %v699 = vpop.permute.xlu0 %698
        %700 = vrot.lane.b32.xlu0 %v624, 8
        %v701 = vpop.permute.xlu0 %700
        %702 = vrot.lane.b32.xlu0 %v626, 8
        %v703 = vpop.permute.xlu0 %702
        %704 = vrot.lane.b32.xlu0 %v629, 8
        %v705 = vpop.permute.xlu0 %704
        %706 = vrot.lane.b32.xlu0 %v631, 8
        %v707 = vpop.permute.xlu0 %706
        %708 = vrot.lane.b32.xlu0 %v634, 8
        %v709 = vpop.permute.xlu0 %708
        %710 = vrot.lane.b32.xlu0 %v636, 8
        %v711 = vpop.permute.xlu0 %710
        %712 = vrot.lane.b32.xlu0 %v639, 8
        %v713 = vpop.permute.xlu0 %712
        %714 = vrot.lane.b32.xlu0 %v641, 8
        %v715 = vpop.permute.xlu0 %714
        %716 = vrot.lane.b32.xlu0 %v644, 8
        %v717 = vpop.permute.xlu0 %716
        %718 = vrot.lane.b32.xlu0 %v646, 8
        %v719 = vpop.permute.xlu0 %718
        %720 = vrot.lane.b32.xlu0 %v649, 8
        %v721 = vpop.permute.xlu0 %720
        %722 = vrot.lane.b32.xlu0 %v651, 8
        %v723 = vpop.permute.xlu0 %722
        %724 = vrot.lane.b32.xlu0 %v654, 8
        %v725 = vpop.permute.xlu0 %724
        %726 = vrot.lane.b32.xlu0 %v656, 8
        %v727 = vpop.permute.xlu0 %726
        %728 = vrot.lane.b32.xlu0 %v659, 8
        %v729 = vpop.permute.xlu0 %728
        %730 = vrot.lane.b32.xlu0 %v661, 8
        %v731 = vpop.permute.xlu0 %730
        %732 = vrot.lane.b32.xlu0 %v664, 8
        %v733 = vpop.permute.xlu0 %732
        %734 = vrot.lane.b32.xlu0 %v666, 8
        %v735 = vpop.permute.xlu0 %734
        %736 = vrot.lane.b32.xlu0 %v669, 8
        %v737 = vpop.permute.xlu0 %736
        %738 = vrot.lane.b32.xlu0 %v671, 8
        %v739 = vpop.permute.xlu0 %738
        %740 = vrot.lane.b32.xlu0 %v674, 8
        %v741 = vpop.permute.xlu0 %740
        %742 = vrot.lane.b32.xlu0 %v676, 8
        %v743 = vpop.permute.xlu0 %742
        %744 = vrot.lane.b32.xlu0 %v679, 8
        %v745 = vpop.permute.xlu0 %744
        %746 = vrot.lane.b32.xlu0 %v681, 8
        %v747 = vpop.permute.xlu0 %746
        %748 = vrot.lane.b32.xlu0 %v684, 8
        %v749 = vpop.permute.xlu0 %748
        %750 = vrot.lane.b32.xlu0 %v686, 8
        %v751 = vpop.permute.xlu0 %750
        %752 = vrot.lane.b32.xlu0 %v689, 8
        %v753 = vpop.permute.xlu0 %752
        %754 = vrot.lane.b32.xlu0 %v691, 8
        %v755 = vpop.permute.xlu0 %754
        %vm788 = vcmask 31744
        %v789 = vsel %vm788, %v338, %v516
        %v790 = vsel %vm788, %v339, %v518
        %v791 = vsel %vm788, %v341, %v520
        %v792 = vsel %vm788, %v342, %v522
        %v793 = vsel %vm788, %v344, %v524
        %v794 = vsel %vm788, %v345, %v526
        %v795 = vsel %vm788, %v347, %v528
        %v796 = vsel %vm788, %v348, %v530
        %v797 = vsel %vm788, %v350, %v532
        %v798 = vsel %vm788, %v351, %v534
        %v799 = vsel %vm788, %v353, %v536
        %v800 = vsel %vm788, %v354, %v538
        %v801 = vsel %vm788, %v356, %v540
        %v802 = vsel %vm788, %v357, %v542
        %v803 = vsel %vm788, %v359, %v544
        %v804 = vsel %vm788, %v360, %v546
        %v805 = vsel %vm788, %v362, %v548
        %v806 = vsel %vm788, %v363, %v550
        %v807 = vsel %vm788, %v365, %v552
        %v808 = vsel %vm788, %v366, %v554
        %v809 = vsel %vm788, %v368, %v556
        %v810 = vsel %vm788, %v369, %v558
        %v811 = vsel %vm788, %v371, %v560
        %v812 = vsel %vm788, %v372, %v562
        %v813 = vsel %vm788, %v374, %v564
        %v814 = vsel %vm788, %v375, %v566
        %v815 = vsel %vm788, %v377, %v568
        %v816 = vsel %vm788, %v378, %v570
        %v817 = vsel %vm788, %v380, %v572
        %v818 = vsel %vm788, %v381, %v574
        %v819 = vsel %vm788, %v383, %v576
        %v820 = vsel %vm788, %v384, %v578
        %vm821 = vcmask 64512
        %v822 = vsel %vm821, %v789, %v693
        %v823 = vsel %vm821, %v790, %v695
        %v824 = vsel %vm821, %v791, %v697
        %v825 = vsel %vm821, %v792, %v699
        %v826 = vsel %vm821, %v793, %v701
        %v827 = vsel %vm821, %v794, %v703
        %v828 = vsel %vm821, %v795, %v705
        %v829 = vsel %vm821, %v796, %v707
        %v830 = vsel %vm821, %v797, %v709
        %v831 = vsel %vm821, %v798, %v711
        %v832 = vsel %vm821, %v799, %v713
        %v833 = vsel %vm821, %v800, %v715
        %v834 = vsel %vm821, %v801, %v717
        %v835 = vsel %vm821, %v802, %v719
        %v836 = vsel %vm821, %v803, %v721
        %v837 = vsel %vm821, %v804, %v723
        %v838 = vsel %vm821, %v805, %v725
        %v839 = vsel %vm821, %v806, %v727
        %v840 = vsel %vm821, %v807, %v729
        %v841 = vsel %vm821, %v808, %v731
        %v842 = vsel %vm821, %v809, %v733
        %v843 = vsel %vm821, %v810, %v735
        %v844 = vsel %vm821, %v811, %v737
        %v845 = vsel %vm821, %v812, %v739
        %v846 = vsel %vm821, %v813, %v741
        %v847 = vsel %vm821, %v814, %v743
        %v848 = vsel %vm821, %v815, %v745
        %v849 = vsel %vm821, %v816, %v747
        %v850 = vsel %vm821, %v817, %v749
        %v851 = vsel %vm821, %v818, %v751
        %v852 = vsel %vm821, %v819, %v753
        %v853 = vsel %vm821, %v820, %v755
        %v854 = vpack.c.bf16 %v823, %v822
        %v855 = vpack.c.bf16 %v825, %v824
        %v856 = vpack.c.bf16 %v827, %v826
        %v857 = vpack.c.bf16 %v829, %v828
        %v858 = vpack.c.bf16 %v831, %v830
        %v859 = vpack.c.bf16 %v833, %v832
        %v860 = vpack.c.bf16 %v835, %v834
        %v861 = vpack.c.bf16 %v837, %v836
        %v862 = vpack.c.bf16 %v839, %v838
        %v863 = vpack.c.bf16 %v841, %v840
        %v864 = vpack.c.bf16 %v843, %v842
        %v865 = vpack.c.bf16 %v845, %v844
        %v866 = vpack.c.bf16 %v847, %v846
        %v867 = vpack.c.bf16 %v849, %v848
        %v868 = vpack.c.bf16 %v851, %v850
        %v869 = vpack.c.bf16 %v853, %v852
        %v870 = vld [vmem:[%s1] sm:$0xf]
        %v871 = vld [vmem:[%s1 + $0x4] sm:$0x3]
        %v872 = vld [vmem:[%s2] sm:$0x1]
        %v874 = vlaneseq
        %v875 = vshrl.u32 %v874, 7
        %v876 = vsub.s32 0, %v875
        %v877 = vrot.slane %v872, %v876
        %v881 = vunpack.c.l.b16 %v870
        %v882 = vunpack.c.l.b16 %v871
        %v883 = vpack.c.b16 %v882, %v881
        %vm884 = vcmask 97280
        %v886 = vsel %vm884, %v854, 0
        %v889 = vsel %vm884, %v855, 0
        %v892 = vsel %vm884, %v856, 0
        %v895 = vsel %vm884, %v857, 0
        %v898 = vsel %vm884, %v858, 0
        %v901 = vsel %vm884, %v859, 0
        %v904 = vsel %vm884, %v860, 0
        %v907 = vsel %vm884, %v861, 0
        %v910 = vsel %vm884, %v862, 0
        %v913 = vsel %vm884, %v863, 0
        %v916 = vsel %vm884, %v864, 0
        %v919 = vsel %vm884, %v865, 0
        %v922 = vsel %vm884, %v866, 0
        %v925 = vsel %vm884, %v867, 0
        %v928 = vsel %vm884, %v868, 0
        %v931 = vsel %vm884, %v869, 0
        %v934 = vsel %vm611, %v883, 0
        %936 = vmatprep.subr.bf16.mxu0 0
        %937 = vmatpush1.bf16.msra.mxu0 %v934
        %938 = vmatprep.subr.bf16.mxu0 0
        %939 = vmatpush1.bf16.msra.mxu0 0
        %940 = vmatprep.subr.bf16.mxu0 0
        %941 = vmatpush1.bf16.msra.mxu0 0
        %942 = vmatprep.subr.bf16.mxu0 0
        %943 = vmatpush1.bf16.msra.mxu0 0
        %944 = vmatprep.subr.bf16.mxu0 0
        %945 = vmatpush1.bf16.msra.mxu0 0
        %946 = vmatprep.subr.bf16.mxu0 0
        %947 = vmatpush1.bf16.msra.mxu0 0
        %948 = vmatprep.subr.bf16.mxu0 0
        %949 = vmatpush1.bf16.msra.mxu0 0
        %950 = vmatprep.subr.bf16.mxu0 0
        %951 = vmatpush1.bf16.msra.mxu0 0
        %952 = vmatprep.subr.bf16.mxu0 0
        %953 = vmatpush1.bf16.msra.mxu0 0
        %954 = vmatprep.subr.bf16.mxu0 0
        %955 = vmatpush1.bf16.msra.mxu0 0
        %956 = vmatprep.subr.bf16.mxu0 0
        %957 = vmatpush1.bf16.msra.mxu0 0
        %958 = vmatprep.subr.bf16.mxu0 0
        %959 = vmatpush1.bf16.msra.mxu0 0
        %960 = vmatprep.subr.bf16.mxu0 0
        %961 = vmatpush1.bf16.msra.mxu0 0
        %962 = vmatprep.subr.bf16.mxu0 0
        %963 = vmatpush1.bf16.msra.mxu0 0
        %964 = vmatprep.subr.bf16.mxu0 0
        %965 = vmatpush1.bf16.msra.mxu0 0
        %966 = vmatprep.subr.bf16.mxu0 0
        %967 = vmatpush1.bf16.msra.mxu0 0
        %968 = vmatprep.mubr.bf16.mxu0 0
        %969 = vmatmul.mubr.bf16.gmra.mrb[0].mxu0 %v886
        %v970 = vpop.f32.mrb[0].mxu0
        %v971 = vadd.f32 %v877, %v970
        %v972 = vpop.f32.mrb[0].mxu0
        %v973 = vpop.f32.mrb[0].mxu0
        %v974 = vadd.f32 %v877, %v973
        %v975 = vpop.f32.mrb[0].mxu0
        %976 = vmatprep.mubr.bf16.mxu0 0
        %977 = vmatmul.mubr.bf16.gmra.mrb[0].mxu0 %v889
        %v978 = vpop.f32.mrb[0].mxu0
        %v979 = vadd.f32 %v877, %v978
        %v980 = vpop.f32.mrb[0].mxu0
        %v981 = vpop.f32.mrb[0].mxu0
        %v982 = vadd.f32 %v877, %v981
        %v983 = vpop.f32.mrb[0].mxu0
        %984 = vmatprep.mubr.bf16.mxu0 0
        %985 = vmatmul.mubr.bf16.gmra.mrb[0].mxu0 %v892
        %v986 = vpop.f32.mrb[0].mxu0
        %v987 = vadd.f32 %v877, %v986
        %v988 = vpop.f32.mrb[0].mxu0
        %v989 = vpop.f32.mrb[0].mxu0
        %v990 = vadd.f32 %v877, %v989
        %v991 = vpop.f32.mrb[0].mxu0
        %992 = vmatprep.mubr.bf16.mxu0 0
        %993 = vmatmul.mubr.bf16.gmra.mrb[0].mxu0 %v895
        %v994 = vpop.f32.mrb[0].mxu0
        %v995 = vadd.f32 %v877, %v994
        %v996 = vpop.f32.mrb[0].mxu0
        %v997 = vpop.f32.mrb[0].mxu0
        %v998 = vadd.f32 %v877, %v997
        %v999 = vpop.f32.mrb[0].mxu0
        %1000 = vmatprep.mubr.bf16.mxu0 0
        %1001 = vmatmul.mubr.bf16.gmra.mrb[0].mxu0 %v898
        %v1002 = vpop.f32.mrb[0].mxu0
        %v1003 = vadd.f32 %v877, %v1002
        %v1004 = vpop.f32.mrb[0].mxu0
        %v1005 = vpop.f32.mrb[0].mxu0
        %v1006 = vadd.f32 %v877, %v1005
        %v1007 = vpop.f32.mrb[0].mxu0
        %1008 = vmatprep.mubr.bf16.mxu0 0
        %1009 = vmatmul.mubr.bf16.gmra.mrb[0].mxu0 %v901
        %v1010 = vpop.f32.mrb[0].mxu0
        %v1011 = vadd.f32 %v877, %v1010
        %v1012 = vpop.f32.mrb[0].mxu0
        %v1013 = vpop.f32.mrb[0].mxu0
        %v1014 = vadd.f32 %v877, %v1013
        %v1015 = vpop.f32.mrb[0].mxu0
        %1016 = vmatprep.mubr.bf16.mxu0 0
        %1017 = vmatmul.mubr.bf16.gmra.mrb[0].mxu0 %v904
        %v1018 = vpop.f32.mrb[0].mxu0
        %v1019 = vadd.f32 %v877, %v1018
        %v1020 = vpop.f32.mrb[0].mxu0
        %v1021 = vpop.f32.mrb[0].mxu0
        %v1022 = vadd.f32 %v877, %v1021
        %v1023 = vpop.f32.mrb[0].mxu0
        %1024 = vmatprep.mubr.bf16.mxu0 0
        %1025 = vmatmul.mubr.bf16.gmra.mrb[0].mxu0 %v907
        %v1026 = vpop.f32.mrb[0].mxu0
        %v1027 = vadd.f32 %v877, %v1026
        %v1028 = vpop.f32.mrb[0].mxu0
        %v1029 = vpop.f32.mrb[0].mxu0
        %v1030 = vadd.f32 %v877, %v1029
        %v1031 = vpop.f32.mrb[0].mxu0
        %1032 = vmatprep.mubr.bf16.mxu0 0
        %1033 = vmatmul.mubr.bf16.gmra.mrb[0].mxu0 %v910
        %v1034 = vpop.f32.mrb[0].mxu0
        %v1035 = vadd.f32 %v877, %v1034
        %v1036 = vpop.f32.mrb[0].mxu0
        %v1037 = vpop.f32.mrb[0].mxu0
        %v1038 = vadd.f32 %v877, %v1037
        %v1039 = vpop.f32.mrb[0].mxu0
        %1040 = vmatprep.mubr.bf16.mxu0 0
        %1041 = vmatmul.mubr.bf16.gmra.mrb[0].mxu0 %v913
        %v1042 = vpop.f32.mrb[0].mxu0
        %v1043 = vadd.f32 %v877, %v1042
        %v1044 = vpop.f32.mrb[0].mxu0
        %v1045 = vpop.f32.mrb[0].mxu0
        %v1046 = vadd.f32 %v877, %v1045
        %v1047 = vpop.f32.mrb[0].mxu0
        %1048 = vmatprep.mubr.bf16.mxu0 0
        %1049 = vmatmul.mubr.bf16.gmra.mrb[0].mxu0 %v916
        %v1050 = vpop.f32.mrb[0].mxu0
        %v1051 = vadd.f32 %v877, %v1050
        %v1052 = vpop.f32.mrb[0].mxu0
        %v1053 = vpop.f32.mrb[0].mxu0
        %v1054 = vadd.f32 %v877, %v1053
        %v1055 = vpop.f32.mrb[0].mxu0
        %1056 = vmatprep.mubr.bf16.mxu0 0
        %1057 = vmatmul.mubr.bf16.gmra.mrb[0].mxu0 %v919
        %v1058 = vpop.f32.mrb[0].mxu0
        %v1059 = vadd.f32 %v877, %v1058
        %v1060 = vpop.f32.mrb[0].mxu0
        %v1061 = vpop.f32.mrb[0].mxu0
        %v1062 = vadd.f32 %v877, %v1061
        %v1063 = vpop.f32.mrb[0].mxu0
        %1064 = vmatprep.mubr.bf16.mxu0 0
        %1065 = vmatmul.mubr.bf16.gmra.mrb[0].mxu0 %v922
        %v1066 = vpop.f32.mrb[0].mxu0
        %v1067 = vadd.f32 %v877, %v1066
        %v1068 = vpop.f32.mrb[0].mxu0
        %v1069 = vpop.f32.mrb[0].mxu0
        %v1070 = vadd.f32 %v877, %v1069
        %v1071 = vpop.f32.mrb[0].mxu0
        %1072 = vmatprep.mubr.bf16.mxu0 0
        %1073 = vmatmul.mubr.bf16.gmra.mrb[0].mxu0 %v925
        %v1074 = vpop.f32.mrb[0].mxu0
        %v1075 = vadd.f32 %v877, %v1074
        %v1076 = vpop.f32.mrb[0].mxu0
        %v1077 = vpop.f32.mrb[0].mxu0
        %v1078 = vadd.f32 %v877, %v1077
        %v1079 = vpop.f32.mrb[0].mxu0
        %1080 = vmatprep.mubr.bf16.mxu0 0
        %1081 = vmatmul.mubr.bf16.gmra.mrb[0].mxu0 %v928
        %v1082 = vpop.f32.mrb[0].mxu0
        %v1083 = vadd.f32 %v877, %v1082
        %v1084 = vpop.f32.mrb[0].mxu0
        %v1085 = vpop.f32.mrb[0].mxu0
        %v1086 = vadd.f32 %v877, %v1085
        %v1087 = vpop.f32.mrb[0].mxu0
        %1088 = vmatprep.mubr.bf16.mxu0 0
        %1089 = vmatmul.mubr.bf16.gmra.mrb[0].mxu0 %v931
        %v1090 = vpop.f32.mrb[0].mxu0
        %v1091 = vadd.f32 %v877, %v1090
        %v1092 = vpop.f32.mrb[0].mxu0
        %v1093 = vpop.f32.mrb[0].mxu0
        %v1094 = vadd.f32 %v877, %v1093
        %v1095 = vpop.f32.mrb[0].mxu0
        %1096 = vdwg.mxu0
        %v1097 = vmax.f32 %v971, 0.0
        %v1098 = vmax.f32 %v974, 0.0
        %v1099 = vmax.f32 %v979, 0.0
        %v1100 = vmax.f32 %v982, 0.0
        %v1101 = vmax.f32 %v987, 0.0
        %v1102 = vmax.f32 %v990, 0.0
        %v1103 = vmax.f32 %v995, 0.0
        %v1104 = vmax.f32 %v998, 0.0
        %v1105 = vmax.f32 %v1003, 0.0
        %v1106 = vmax.f32 %v1006, 0.0
        %v1107 = vmax.f32 %v1011, 0.0
        %v1108 = vmax.f32 %v1014, 0.0
        %v1109 = vmax.f32 %v1019, 0.0
        %v1110 = vmax.f32 %v1022, 0.0
        %v1111 = vmax.f32 %v1027, 0.0
        %v1112 = vmax.f32 %v1030, 0.0
        %v1113 = vmax.f32 %v1035, 0.0
        %v1114 = vmax.f32 %v1038, 0.0
        %v1115 = vmax.f32 %v1043, 0.0
        %v1116 = vmax.f32 %v1046, 0.0
        %v1117 = vmax.f32 %v1051, 0.0
        %v1118 = vmax.f32 %v1054, 0.0
        %v1119 = vmax.f32 %v1059, 0.0
        %v1120 = vmax.f32 %v1062, 0.0
        %v1121 = vmax.f32 %v1067, 0.0
        %v1122 = vmax.f32 %v1070, 0.0
        %v1123 = vmax.f32 %v1075, 0.0
        %v1124 = vmax.f32 %v1078, 0.0
        %v1125 = vmax.f32 %v1083, 0.0
        %v1126 = vmax.f32 %v1086, 0.0
        %v1127 = vmax.f32 %v1091, 0.0
        %v1128 = vmax.f32 %v1094, 0.0
        %vm1161 = vcmask 1040384
        %v1162 = vrot.slane %v1097, 7
        %v1163 = vrot.slane %v1098, 7
        %v1164 = vsel %vm1161, %v1162, %v1163
        %v1165 = vrot.slane %v1099, 7
        %v1166 = vrot.slane %v1100, 7
        %v1167 = vsel %vm1161, %v1165, %v1166
        %v1168 = vrot.slane %v1101, 7
        %v1169 = vrot.slane %v1102, 7
        %v1170 = vsel %vm1161, %v1168, %v1169
        %v1171 = vrot.slane %v1103, 7
        %v1172 = vrot.slane %v1104, 7
        %v1173 = vsel %vm1161, %v1171, %v1172
        %v1174 = vrot.slane %v1105, 7
        %v1175 = vrot.slane %v1106, 7
        %v1176 = vsel %vm1161, %v1174, %v1175
        %v1177 = vrot.slane %v1107, 7
        %v1178 = vrot.slane %v1108, 7
        %v1179 = vsel %vm1161, %v1177, %v1178
        %v1180 = vrot.slane %v1109, 7
        %v1181 = vrot.slane %v1110, 7
        %v1182 = vsel %vm1161, %v1180, %v1181
        %v1183 = vrot.slane %v1111, 7
        %v1184 = vrot.slane %v1112, 7
        %v1185 = vsel %vm1161, %v1183, %v1184
        %v1186 = vrot.slane %v1113, 7
        %v1187 = vrot.slane %v1114, 7
        %v1188 = vsel %vm1161, %v1186, %v1187
        %v1189 = vrot.slane %v1115, 7
        %v1190 = vrot.slane %v1116, 7
        %v1191 = vsel %vm1161, %v1189, %v1190
        %v1192 = vrot.slane %v1117, 7
        %v1193 = vrot.slane %v1118, 7
        %v1194 = vsel %vm1161, %v1192, %v1193
        %v1195 = vrot.slane %v1119, 7
        %v1196 = vrot.slane %v1120, 7
        %v1197 = vsel %vm1161, %v1195, %v1196
        %v1198 = vrot.slane %v1121, 7
        %v1199 = vrot.slane %v1122, 7
        %v1200 = vsel %vm1161, %v1198, %v1199
        %v1201 = vrot.slane %v1123, 7
        %v1202 = vrot.slane %v1124, 7
        %v1203 = vsel %vm1161, %v1201, %v1202
        %v1204 = vrot.slane %v1125, 7
        %v1205 = vrot.slane %v1126, 7
        %v1206 = vsel %vm1161, %v1204, %v1205
        %v1207 = vrot.slane %v1127, 7
        %v1208 = vrot.slane %v1128, 7
        %v1209 = vsel %vm1161, %v1207, %v1208
        %v1258 = vsel %vm1161, 0.0, %v1162
        %v1259 = vsel %vm1161, 0.0, %v1165
        %v1260 = vsel %vm1161, 0.0, %v1168
        %v1261 = vsel %vm1161, 0.0, %v1171
        %v1262 = vsel %vm1161, 0.0, %v1174
        %v1263 = vsel %vm1161, 0.0, %v1177
        %v1264 = vsel %vm1161, 0.0, %v1180
        %v1265 = vsel %vm1161, 0.0, %v1183
        %v1266 = vsel %vm1161, 0.0, %v1186
        %v1267 = vsel %vm1161, 0.0, %v1189
        %v1268 = vsel %vm1161, 0.0, %v1192
        %v1269 = vsel %vm1161, 0.0, %v1195
        %v1270 = vsel %vm1161, 0.0, %v1198
        %v1271 = vsel %vm1161, 0.0, %v1201
        %v1272 = vsel %vm1161, 0.0, %v1204
        %v1273 = vsel %vm1161, 0.0, %v1207
        %v1274 = vsel %vm1161, %v1163, 0.0
        %v1275 = vsel %vm1161, %v1166, 0.0
        %v1276 = vsel %vm1161, %v1169, 0.0
        %v1277 = vsel %vm1161, %v1172, 0.0
        %v1278 = vsel %vm1161, %v1175, 0.0
        %v1279 = vsel %vm1161, %v1178, 0.0
        %v1280 = vsel %vm1161, %v1181, 0.0
        %v1281 = vsel %vm1161, %v1184, 0.0
        %v1282 = vsel %vm1161, %v1187, 0.0
        %v1283 = vsel %vm1161, %v1190, 0.0
        %v1284 = vsel %vm1161, %v1193, 0.0
        %v1285 = vsel %vm1161, %v1196, 0.0
        %v1286 = vsel %vm1161, %v1199, 0.0
        %v1287 = vsel %vm1161, %v1202, 0.0
        %v1288 = vsel %vm1161, %v1205, 0.0
        %v1289 = vsel %vm1161, %v1208, 0.0
        %v1322 = vrot.slane %v1258, 1
        %v1323 = vrot.slane %v1164, 1
        %v1324 = vsel %vm434, %v1322, %v1323
        %v1325 = vrot.slane %v1274, 1
        %v1326 = vsel %vm434, %v1323, %v1325
        %v1327 = vrot.slane %v1259, 1
        %v1328 = vrot.slane %v1167, 1
        %v1329 = vsel %vm434, %v1327, %v1328
        %v1330 = vrot.slane %v1275, 1
        %v1331 = vsel %vm434, %v1328, %v1330
        %v1332 = vrot.slane %v1260, 1
        %v1333 = vrot.slane %v1170, 1
        %v1334 = vsel %vm434, %v1332, %v1333
        %v1335 = vrot.slane %v1276, 1
        %v1336 = vsel %vm434, %v1333, %v1335
        %v1337 = vrot.slane %v1261, 1
        %v1338 = vrot.slane %v1173, 1
        %v1339 = vsel %vm434, %v1337, %v1338
        %v1340 = vrot.slane %v1277, 1
        %v1341 = vsel %vm434, %v1338, %v1340
        %v1342 = vrot.slane %v1262, 1
        %v1343 = vrot.slane %v1176, 1
        %v1344 = vsel %vm434, %v1342, %v1343
        %v1345 = vrot.slane %v1278, 1
        %v1346 = vsel %vm434, %v1343, %v1345
        %v1347 = vrot.slane %v1263, 1
        %v1348 = vrot.slane %v1179, 1
        %v1349 = vsel %vm434, %v1347, %v1348
        %v1350 = vrot.slane %v1279, 1
        %v1351 = vsel %vm434, %v1348, %v1350
        %v1352 = vrot.slane %v1264, 1
        %v1353 = vrot.slane %v1182, 1
        %v1354 = vsel %vm434, %v1352, %v1353
        %v1355 = vrot.slane %v1280, 1
        %v1356 = vsel %vm434, %v1353, %v1355
        %v1357 = vrot.slane %v1265, 1
        %v1358 = vrot.slane %v1185, 1
        %v1359 = vsel %vm434, %v1357, %v1358
        %v1360 = vrot.slane %v1281, 1
        %v1361 = vsel %vm434, %v1358, %v1360
        %v1362 = vrot.slane %v1266, 1
        %v1363 = vrot.slane %v1188, 1
        %v1364 = vsel %vm434, %v1362, %v1363
        %v1365 = vrot.slane %v1282, 1
        %v1366 = vsel %vm434, %v1363, %v1365
        %v1367 = vrot.slane %v1267, 1
        %v1368 = vrot.slane %v1191, 1
        %v1369 = vsel %vm434, %v1367, %v1368
        %v1370 = vrot.slane %v1283, 1
        %v1371 = vsel %vm434, %v1368, %v1370
        %v1372 = vrot.slane %v1268, 1
        %v1373 = vrot.slane %v1194, 1
        %v1374 = vsel %vm434, %v1372, %v1373
        %v1375 = vrot.slane %v1284, 1
        %v1376 = vsel %vm434, %v1373, %v1375
        %v1377 = vrot.slane %v1269, 1
        %v1378 = vrot.slane %v1197, 1
        %v1379 = vsel %vm434, %v1377, %v1378
        %v1380 = vrot.slane %v1285, 1
        %v1381 = vsel %vm434, %v1378, %v1380
        %v1382 = vrot.slane %v1270, 1
        %v1383 = vrot.slane %v1200, 1
        %v1384 = vsel %vm434, %v1382, %v1383
        %v1385 = vrot.slane %v1286, 1
        %v1386 = vsel %vm434, %v1383, %v1385
        %v1387 = vrot.slane %v1271, 1
        %v1388 = vrot.slane %v1203, 1
        %v1389 = vsel %vm434, %v1387, %v1388
        %v1390 = vrot.slane %v1287, 1
        %v1391 = vsel %vm434, %v1388, %v1390
        %v1392 = vrot.slane %v1272, 1
        %v1393 = vrot.slane %v1206, 1
        %v1394 = vsel %vm434, %v1392, %v1393
        %v1395 = vrot.slane %v1288, 1
        %v1396 = vsel %vm434, %v1393, %v1395
        %v1397 = vrot.slane %v1273, 1
        %v1398 = vrot.slane %v1209, 1
        %v1399 = vsel %vm434, %v1397, %v1398
        %v1400 = vrot.slane %v1289, 1
        %v1401 = vsel %vm434, %v1398, %v1400
        %v1434 = vrot.slane %v1258, 2
        %v1435 = vrot.slane %v1164, 2
        %v1436 = vsel %vm611, %v1434, %v1435
        %v1437 = vrot.slane %v1274, 2
        %v1438 = vsel %vm611, %v1435, %v1437
        %v1439 = vrot.slane %v1259, 2
        %v1440 = vrot.slane %v1167, 2
        %v1441 = vsel %vm611, %v1439, %v1440
        %v1442 = vrot.slane %v1275, 2
        %v1443 = vsel %vm611, %v1440, %v1442
        %v1444 = vrot.slane %v1260, 2
        %v1445 = vrot.slane %v1170, 2
        %v1446 = vsel %vm611, %v1444, %v1445
        %v1447 = vrot.slane %v1276, 2
        %v1448 = vsel %vm611, %v1445, %v1447
        %v1449 = vrot.slane %v1261, 2
        %v1450 = vrot.slane %v1173, 2
        %v1451 = vsel %vm611, %v1449, %v1450
        %v1452 = vrot.slane %v1277, 2
        %v1453 = vsel %vm611, %v1450, %v1452
        %v1454 = vrot.slane %v1262, 2
        %v1455 = vrot.slane %v1176, 2
        %v1456 = vsel %vm611, %v1454, %v1455
        %v1457 = vrot.slane %v1278, 2
        %v1458 = vsel %vm611, %v1455, %v1457
        %v1459 = vrot.slane %v1263, 2
        %v1460 = vrot.slane %v1179, 2
        %v1461 = vsel %vm611, %v1459, %v1460
        %v1462 = vrot.slane %v1279, 2
        %v1463 = vsel %vm611, %v1460, %v1462
        %v1464 = vrot.slane %v1264, 2
        %v1465 = vrot.slane %v1182, 2
        %v1466 = vsel %vm611, %v1464, %v1465
        %v1467 = vrot.slane %v1280, 2
        %v1468 = vsel %vm611, %v1465, %v1467
        %v1469 = vrot.slane %v1265, 2
        %v1470 = vrot.slane %v1185, 2
        %v1471 = vsel %vm611, %v1469, %v1470
        %v1472 = vrot.slane %v1281, 2
        %v1473 = vsel %vm611, %v1470, %v1472
        %v1474 = vrot.slane %v1266, 2
        %v1475 = vrot.slane %v1188, 2
        %v1476 = vsel %vm611, %v1474, %v1475
        %v1477 = vrot.slane %v1282, 2
        %v1478 = vsel %vm611, %v1475, %v1477
        %v1479 = vrot.slane %v1267, 2
        %v1480 = vrot.slane %v1191, 2
        %v1481 = vsel %vm611, %v1479, %v1480
        %v1482 = vrot.slane %v1283, 2
        %v1483 = vsel %vm611, %v1480, %v1482
        %v1484 = vrot.slane %v1268, 2
        %v1485 = vrot.slane %v1194, 2
        %v1486 = vsel %vm611, %v1484, %v1485
        %v1487 = vrot.slane %v1284, 2
        %v1488 = vsel %vm611, %v1485, %v1487
        %v1489 = vrot.slane %v1269, 2
        %v1490 = vrot.slane %v1197, 2
        %v1491 = vsel %vm611, %v1489, %v1490
        %v1492 = vrot.slane %v1285, 2
        %v1493 = vsel %vm611, %v1490, %v1492
        %v1494 = vrot.slane %v1270, 2
        %v1495 = vrot.slane %v1200, 2
        %v1496 = vsel %vm611, %v1494, %v1495
        %v1497 = vrot.slane %v1286, 2
        %v1498 = vsel %vm611, %v1495, %v1497
        %v1499 = vrot.slane %v1271, 2
        %v1500 = vrot.slane %v1203, 2
        %v1501 = vsel %vm611, %v1499, %v1500
        %v1502 = vrot.slane %v1287, 2
        %v1503 = vsel %vm611, %v1500, %v1502
        %v1504 = vrot.slane %v1272, 2
        %v1505 = vrot.slane %v1206, 2
        %v1506 = vsel %vm611, %v1504, %v1505
        %v1507 = vrot.slane %v1288, 2
        %v1508 = vsel %vm611, %v1505, %v1507
        %v1509 = vrot.slane %v1273, 2
        %v1510 = vrot.slane %v1209, 2
        %v1511 = vsel %vm611, %v1509, %v1510
        %v1512 = vrot.slane %v1289, 2
        %v1513 = vsel %vm611, %v1510, %v1512
        %v1546 = vpack.c.bf16 %v1164, %v1258
        %v1547 = vpack.c.bf16 %v1326, %v1324
        %v1548 = vpack.c.bf16 %v1438, %v1436
        %v1549 = vpack.c.bf16 %v1167, %v1259
        %v1550 = vpack.c.bf16 %v1331, %v1329
        %v1551 = vpack.c.bf16 %v1443, %v1441
        %v1552 = vpack.c.bf16 %v1170, %v1260
        %v1553 = vpack.c.bf16 %v1336, %v1334
        %v1554 = vpack.c.bf16 %v1448, %v1446
        %v1555 = vpack.c.bf16 %v1173, %v1261
        %v1556 = vpack.c.bf16 %v1341, %v1339
        %v1557 = vpack.c.bf16 %v1453, %v1451
        %v1558 = vpack.c.bf16 %v1176, %v1262
        %v1559 = vpack.c.bf16 %v1346, %v1344
        %v1560 = vpack.c.bf16 %v1458, %v1456
        %v1561 = vpack.c.bf16 %v1179, %v1263
        %v1562 = vpack.c.bf16 %v1351, %v1349
        %v1563 = vpack.c.bf16 %v1463, %v1461
        %v1564 = vpack.c.bf16 %v1182, %v1264
        %v1565 = vpack.c.bf16 %v1356, %v1354
        %v1566 = vpack.c.bf16 %v1468, %v1466
        %v1567 = vpack.c.bf16 %v1185, %v1265
        %v1568 = vpack.c.bf16 %v1361, %v1359
        %v1569 = vpack.c.bf16 %v1473, %v1471
        %v1570 = vpack.c.bf16 %v1188, %v1266
        %v1571 = vpack.c.bf16 %v1366, %v1364
        %v1572 = vpack.c.bf16 %v1478, %v1476
        %v1573 = vpack.c.bf16 %v1191, %v1267
        %v1574 = vpack.c.bf16 %v1371, %v1369
        %v1575 = vpack.c.bf16 %v1483, %v1481
        %v1576 = vpack.c.bf16 %v1194, %v1268
        %v1577 = vpack.c.bf16 %v1376, %v1374
        %v1578 = vpack.c.bf16 %v1488, %v1486
        %v1579 = vpack.c.bf16 %v1197, %v1269
        %v1580 = vpack.c.bf16 %v1381, %v1379
        %v1581 = vpack.c.bf16 %v1493, %v1491
        %v1582 = vpack.c.bf16 %v1200, %v1270
        %v1583 = vpack.c.bf16 %v1386, %v1384
        %v1584 = vpack.c.bf16 %v1498, %v1496
        %v1585 = vpack.c.bf16 %v1203, %v1271
        %v1586 = vpack.c.bf16 %v1391, %v1389
        %v1587 = vpack.c.bf16 %v1503, %v1501
        %v1588 = vpack.c.bf16 %v1206, %v1272
        %v1589 = vpack.c.bf16 %v1396, %v1394
        %v1590 = vpack.c.bf16 %v1508, %v1506
        %v1591 = vpack.c.bf16 %v1209, %v1273
        %v1592 = vpack.c.bf16 %v1401, %v1399
        %v1593 = vpack.c.bf16 %v1513, %v1511
        %v1594 = vld [vmem:[%s3] sm:$0xf]
        %v1595 = vld [vmem:[%s3 + $0x4] sm:$0xf]
        %v1596 = vld [vmem:[%s3 + $0x8] sm:$0xf]
        %v1597 = vld [vmem:[%s3 + $0xc] sm:$0xf]
        %v1598 = vld [vmem:[%s3 + $0x10] sm:$0xf]
        %v1599 = vld [vmem:[%s3 + $0x14] sm:$0xf]
        %v1600 = vld [vmem:[%s3 + $0x18] sm:$0xf]
        %v1601 = vld [vmem:[%s3 + $0x1c] sm:$0xf]
        %v1602 = vld [vmem:[%s3 + $0x20] sm:$0xf]
        %v1603 = vld [vmem:[%s3 + $0x24] sm:$0xf]
        %v1604 = vld [vmem:[%s3 + $0x28] sm:$0xf]
        %v1605 = vld [vmem:[%s3 + $0x2c] sm:$0xf]
        %v1606 = vld [vmem:[%s3 + $0x30] sm:$0xf]
        %v1607 = vld [vmem:[%s3 + $0x34] sm:$0xf]
        %v1608 = vld [vmem:[%s3 + $0x38] sm:$0xf]
        %v1609 = vld [vmem:[%s3 + $0x3c] sm:$0xf]
        %v1610 = vld [vmem:[%s3 + $0x40] sm:$0xf]
        %v1611 = vld [vmem:[%s3 + $0x44] sm:$0xf]
        %v1612 = vld [vmem:[%s3 + $0x48] sm:$0xf]
        %v1613 = vld [vmem:[%s3 + $0x4c] sm:$0xf]
        %v1614 = vld [vmem:[%s3 + $0x50] sm:$0xf]
        %v1615 = vld [vmem:[%s3 + $0x54] sm:$0xf]
        %v1616 = vld [vmem:[%s3 + $0x58] sm:$0xf]
        %v1617 = vld [vmem:[%s3 + $0x5c] sm:$0xf]
        %v1618 = vld [vmem:[%s3 + $0x60] sm:$0xf]
        %v1619 = vld [vmem:[%s3 + $0x64] sm:$0xf]
        %v1620 = vld [vmem:[%s3 + $0x68] sm:$0xf]
        %v1621 = vld [vmem:[%s3 + $0x6c] sm:$0xf]
        %v1622 = vld [vmem:[%s3 + $0x70] sm:$0xf]
        %v1623 = vld [vmem:[%s3 + $0x74] sm:$0xf]
        %v1624 = vld [vmem:[%s3 + $0x78] sm:$0xf]
        %v1625 = vld [vmem:[%s3 + $0x7c] sm:$0xf]
        %v1626 = vld [vmem:[%s3 + $0x80] sm:$0xf]
        %v1627 = vld [vmem:[%s3 + $0x84] sm:$0xf]
        %v1628 = vld [vmem:[%s3 + $0x88] sm:$0xf]
        %v1629 = vld [vmem:[%s3 + $0x8c] sm:$0xf]
        %v1630 = vld [vmem:[%s3 + $0x90] sm:$0xf]
        %v1631 = vld [vmem:[%s3 + $0x94] sm:$0xf]
        %v1632 = vld [vmem:[%s3 + $0x98] sm:$0xf]
        %v1633 = vld [vmem:[%s3 + $0x9c] sm:$0xf]
        %v1634 = vld [vmem:[%s3 + $0xa0] sm:$0xf]
        %v1635 = vld [vmem:[%s3 + $0xa4] sm:$0xf]
        %v1636 = vld [vmem:[%s3 + $0xa8] sm:$0xf]
        %v1637 = vld [vmem:[%s3 + $0xac] sm:$0xf]
        %v1638 = vld [vmem:[%s3 + $0xb0] sm:$0xf]
        %v1639 = vld [vmem:[%s3 + $0xb4] sm:$0xf]
        %v1640 = vld [vmem:[%s3 + $0xb8] sm:$0xf]
        %v1641 = vld [vmem:[%s3 + $0xbc] sm:$0xf]
        %v1642 = vld [vmem:[%s4] sm:$0x1]
        %v1644 = vlaneseq
        %v1645 = vshrl.u32 %v1644, 7
        %v1646 = vsub.s32 0, %v1645
        %v1647 = vrot.slane %v1642, %v1646
        %v1697 = vunpack.c.l.b16 %v1594
        %v1698 = vunpack.c.l.b16 %v1595
        %v1699 = vunpack.c.l.b16 %v1596
        %v1700 = vunpack.c.l.b16 %v1597
        %v1701 = vunpack.c.l.b16 %v1598
        %v1702 = vunpack.c.l.b16 %v1599
        %v1703 = vunpack.c.l.b16 %v1600
        %v1704 = vunpack.c.l.b16 %v1601
        %v1705 = vunpack.c.l.b16 %v1602
        %v1706 = vunpack.c.l.b16 %v1603
        %v1707 = vunpack.c.l.b16 %v1604
        %v1708 = vunpack.c.l.b16 %v1605
        %v1709 = vunpack.c.l.b16 %v1606
        %v1710 = vunpack.c.l.b16 %v1607
        %v1711 = vunpack.c.l.b16 %v1608
        %v1712 = vunpack.c.l.b16 %v1609
        %v1713 = vunpack.c.l.b16 %v1610
        %v1714 = vunpack.c.l.b16 %v1611
        %v1715 = vunpack.c.l.b16 %v1612
        %v1716 = vunpack.c.l.b16 %v1613
        %v1717 = vunpack.c.l.b16 %v1614
        %v1718 = vunpack.c.l.b16 %v1615
        %v1719 = vunpack.c.l.b16 %v1616
        %v1720 = vunpack.c.l.b16 %v1617
        %v1721 = vunpack.c.l.b16 %v1618
        %v1722 = vunpack.c.l.b16 %v1619
        %v1723 = vunpack.c.l.b16 %v1620
        %v1724 = vunpack.c.l.b16 %v1621
        %v1725 = vunpack.c.l.b16 %v1622
        %v1726 = vunpack.c.l.b16 %v1623
        %v1727 = vunpack.c.l.b16 %v1624
        %v1728 = vunpack.c.l.b16 %v1625
        %v1729 = vunpack.c.l.b16 %v1626
        %v1730 = vunpack.c.l.b16 %v1627
        %v1731 = vunpack.c.l.b16 %v1628
        %v1732 = vunpack.c.l.b16 %v1629
        %v1733 = vunpack.c.l.b16 %v1630
        %v1734 = vunpack.c.l.b16 %v1631
        %v1735 = vunpack.c.l.b16 %v1632
        %v1736 = vunpack.c.l.b16 %v1633
        %v1737 = vunpack.c.l.b16 %v1634
        %v1738 = vunpack.c.l.b16 %v1635
        %v1739 = vunpack.c.l.b16 %v1636
        %v1740 = vunpack.c.l.b16 %v1637
        %v1741 = vunpack.c.l.b16 %v1638
        %v1742 = vunpack.c.l.b16 %v1639
        %v1743 = vunpack.c.l.b16 %v1640
        %v1744 = vunpack.c.l.b16 %v1641
        %v1745 = vpack.c.b16 %v1698, %v1697
        %v1746 = vpack.c.b16 %v1700, %v1699
        %v1747 = vpack.c.b16 %v1702, %v1701
        %v1748 = vpack.c.b16 %v1704, %v1703
        %v1749 = vpack.c.b16 %v1706, %v1705
        %v1750 = vpack.c.b16 %v1708, %v1707
        %v1751 = vpack.c.b16 %v1710, %v1709
        %v1752 = vpack.c.b16 %v1712, %v1711
        %v1753 = vpack.c.b16 %v1714, %v1713
        %v1754 = vpack.c.b16 %v1716, %v1715
        %v1755 = vpack.c.b16 %v1718, %v1717
        %v1756 = vpack.c.b16 %v1720, %v1719
        %v1757 = vpack.c.b16 %v1722, %v1721
        %v1758 = vpack.c.b16 %v1724, %v1723
        %v1759 = vpack.c.b16 %v1726, %v1725
        %v1760 = vpack.c.b16 %v1728, %v1727
        %v1761 = vpack.c.b16 %v1730, %v1729
        %v1762 = vpack.c.b16 %v1732, %v1731
        %v1763 = vpack.c.b16 %v1734, %v1733
        %v1764 = vpack.c.b16 %v1736, %v1735
        %v1765 = vpack.c.b16 %v1738, %v1737
        %v1766 = vpack.c.b16 %v1740, %v1739
        %v1767 = vpack.c.b16 %v1742, %v1741
        %v1768 = vpack.c.b16 %v1744, %v1743
        %1793 = vmatprep.subr.bf16.mxu0 0
        %1794 = vmatpush1.bf16.msra.mxu0 %v1745
        %1795 = vmatprep.subr.bf16.mxu0 0
        %1796 = vmatpush1.bf16.msra.mxu0 %v1746
        %1797 = vmatprep.subr.bf16.mxu0 0
        %1798 = vmatpush1.bf16.msra.mxu0 %v1747
        %1799 = vmatprep.subr.bf16.mxu0 0
        %1800 = vmatpush1.bf16.msra.mxu0 %v1748
        %1801 = vmatprep.subr.bf16.mxu0 0
        %1802 = vmatpush1.bf16.msra.mxu0 %v1749
        %1803 = vmatprep.subr.bf16.mxu0 0
        %1804 = vmatpush1.bf16.msra.mxu0 %v1750
        %1805 = vmatprep.subr.bf16.mxu0 0
        %1806 = vmatpush1.bf16.msra.mxu0 %v1751
        %1807 = vmatprep.subr.bf16.mxu0 0
        %1808 = vmatpush1.bf16.msra.mxu0 %v1752
        %1809 = vmatprep.subr.bf16.mxu0 0
        %1810 = vmatpush1.bf16.msra.mxu0 %v1753
        %1811 = vmatprep.subr.bf16.mxu0 0
        %1812 = vmatpush1.bf16.msra.mxu0 %v1754
        %1813 = vmatprep.subr.bf16.mxu0 0
        %1814 = vmatpush1.bf16.msra.mxu0 %v1755
        %1815 = vmatprep.subr.bf16.mxu0 0
        %1816 = vmatpush1.bf16.msra.mxu0 %v1756
        %1817 = vmatprep.subr.bf16.mxu0 0
        %1818 = vmatpush1.bf16.msra.mxu0 %v1757
        %1819 = vmatprep.subr.bf16.mxu0 0
        %1820 = vmatpush1.bf16.msra.mxu0 %v1758
        %1821 = vmatprep.subr.bf16.mxu0 0
        %1822 = vmatpush1.bf16.msra.mxu0 %v1759
        %1823 = vmatprep.subr.bf16.mxu0 0
        %1824 = vmatpush1.bf16.msra.mxu0 %v1760
        %1825 = vmatprep.mubr.bf16.mxu0 %v1547
        %1826 = vmatmul.mubr.bf16.gmra.mrb[0].mxu0 %v1546
        %v1827 = vpop.f32.mrb[0].mxu0
        %v1828 = vadd.f32 %v1647, %v1827
        %v1829 = vpop.f32.mrb[0].mxu0
        %v1830 = vpop.f32.mrb[0].mxu0
        %v1831 = vadd.f32 %v1647, %v1830
        %v1832 = vpop.f32.mrb[0].mxu0
        %1833 = vmatprep.mubr.bf16.mxu0 %v1550
        %1834 = vmatmul.mubr.bf16.gmra.mrb[0].mxu0 %v1549
        %v1835 = vpop.f32.mrb[0].mxu0
        %v1836 = vadd.f32 %v1647, %v1835
        %v1837 = vpop.f32.mrb[0].mxu0
        %v1838 = vpop.f32.mrb[0].mxu0
        %v1839 = vadd.f32 %v1647, %v1838
        %v1840 = vpop.f32.mrb[0].mxu0
        %1841 = vmatprep.mubr.bf16.mxu0 %v1553
        %1842 = vmatmul.mubr.bf16.gmra.mrb[0].mxu0 %v1552
        %v1843 = vpop.f32.mrb[0].mxu0
        %v1844 = vadd.f32 %v1647, %v1843
        %v1845 = vpop.f32.mrb[0].mxu0
        %v1846 = vpop.f32.mrb[0].mxu0
        %v1847 = vadd.f32 %v1647, %v1846
        %v1848 = vpop.f32.mrb[0].mxu0
        %1849 = vmatprep.mubr.bf16.mxu0 %v1556
        %1850 = vmatmul.mubr.bf16.gmra.mrb[0].mxu0 %v1555
        %v1851 = vpop.f32.mrb[0].mxu0
        %v1852 = vadd.f32 %v1647, %v1851
        %v1853 = vpop.f32.mrb[0].mxu0
        %v1854 = vpop.f32.mrb[0].mxu0
        %v1855 = vadd.f32 %v1647, %v1854
        %v1856 = vpop.f32.mrb[0].mxu0
        %1857 = vmatprep.mubr.bf16.mxu0 %v1559
        %1858 = vmatmul.mubr.bf16.gmra.mrb[0].mxu0 %v1558
        %v1859 = vpop.f32.mrb[0].mxu0
        %v1860 = vadd.f32 %v1647, %v1859
        %v1861 = vpop.f32.mrb[0].mxu0
        %v1862 = vpop.f32.mrb[0].mxu0
        %v1863 = vadd.f32 %v1647, %v1862
        %v1864 = vpop.f32.mrb[0].mxu0
        %1865 = vmatprep.mubr.bf16.mxu0 %v1562
        %1866 = vmatmul.mubr.bf16.gmra.mrb[0].mxu0 %v1561
        %v1867 = vpop.f32.mrb[0].mxu0
        %v1868 = vadd.f32 %v1647, %v1867
        %v1869 = vpop.f32.mrb[0].mxu0
        %v1870 = vpop.f32.mrb[0].mxu0
        %v1871 = vadd.f32 %v1647, %v1870
        %v1872 = vpop.f32.mrb[0].mxu0
        %1873 = vmatprep.mubr.bf16.mxu0 %v1565
        %1874 = vmatmul.mubr.bf16.gmra.mrb[0].mxu0 %v1564
        %v1875 = vpop.f32.mrb[0].mxu0
        %v1876 = vadd.f32 %v1647, %v1875
        %v1877 = vpop.f32.mrb[0].mxu0
        %v1878 = vpop.f32.mrb[0].mxu0
        %v1879 = vadd.f32 %v1647, %v1878
        %v1880 = vpop.f32.mrb[0].mxu0
        %1881 = vmatprep.mubr.bf16.mxu0 %v1568
        %1882 = vmatmul.mubr.bf16.gmra.mrb[0].mxu0 %v1567
        %v1883 = vpop.f32.mrb[0].mxu0
        %v1884 = vadd.f32 %v1647, %v1883
        %v1885 = vpop.f32.mrb[0].mxu0
        %v1886 = vpop.f32.mrb[0].mxu0
        %v1887 = vadd.f32 %v1647, %v1886
        %v1888 = vpop.f32.mrb[0].mxu0
        %1889 = vmatprep.mubr.bf16.mxu0 %v1571
        %1890 = vmatmul.mubr.bf16.gmra.mrb[0].mxu0 %v1570
        %v1891 = vpop.f32.mrb[0].mxu0
        %v1892 = vadd.f32 %v1647, %v1891
        %v1893 = vpop.f32.mrb[0].mxu0
        %v1894 = vpop.f32.mrb[0].mxu0
        %v1895 = vadd.f32 %v1647, %v1894
        %v1896 = vpop.f32.mrb[0].mxu0
        %1897 = vmatprep.mubr.bf16.mxu0 %v1574
        %1898 = vmatmul.mubr.bf16.gmra.mrb[0].mxu0 %v1573
        %v1899 = vpop.f32.mrb[0].mxu0
        %v1900 = vadd.f32 %v1647, %v1899
        %v1901 = vpop.f32.mrb[0].mxu0
        %v1902 = vpop.f32.mrb[0].mxu0
        %v1903 = vadd.f32 %v1647, %v1902
        %v1904 = vpop.f32.mrb[0].mxu0
        %1905 = vmatprep.mubr.bf16.mxu0 %v1577
        %1906 = vmatmul.mubr.bf16.gmra.mrb[0].mxu0 %v1576
        %v1907 = vpop.f32.mrb[0].mxu0
        %v1908 = vadd.f32 %v1647, %v1907
        %v1909 = vpop.f32.mrb[0].mxu0
        %v1910 = vpop.f32.mrb[0].mxu0
        %v1911 = vadd.f32 %v1647, %v1910
        %v1912 = vpop.f32.mrb[0].mxu0
        %1913 = vmatprep.mubr.bf16.mxu0 %v1580
        %1914 = vmatmul.mubr.bf16.gmra.mrb[0].mxu0 %v1579
        %v1915 = vpop.f32.mrb[0].mxu0
        %v1916 = vadd.f32 %v1647, %v1915
        %v1917 = vpop.f32.mrb[0].mxu0
        %v1918 = vpop.f32.mrb[0].mxu0
        %v1919 = vadd.f32 %v1647, %v1918
        %v1920 = vpop.f32.mrb[0].mxu0
        %1921 = vmatprep.mubr.bf16.mxu0 %v1583
        %1922 = vmatmul.mubr.bf16.gmra.mrb[0].mxu0 %v1582
        %v1923 = vpop.f32.mrb[0].mxu0
        %v1924 = vadd.f32 %v1647, %v1923
        %v1925 = vpop.f32.mrb[0].mxu0
        %v1926 = vpop.f32.mrb[0].mxu0
        %v1927 = vadd.f32 %v1647, %v1926
        %v1928 = vpop.f32.mrb[0].mxu0
        %1929 = vmatprep.mubr.bf16.mxu0 %v1586
        %1930 = vmatmul.mubr.bf16.gmra.mrb[0].mxu0 %v1585
        %v1931 = vpop.f32.mrb[0].mxu0
        %v1932 = vadd.f32 %v1647, %v1931
        %v1933 = vpop.f32.mrb[0].mxu0
        %v1934 = vpop.f32.mrb[0].mxu0
        %v1935 = vadd.f32 %v1647, %v1934
        %v1936 = vpop.f32.mrb[0].mxu0
        %1937 = vmatprep.mubr.bf16.mxu0 %v1589
        %1938 = vmatmul.mubr.bf16.gmra.mrb[0].mxu0 %v1588
        %v1939 = vpop.f32.mrb[0].mxu0
        %v1940 = vadd.f32 %v1647, %v1939
        %v1941 = vpop.f32.mrb[0].mxu0
        %v1942 = vpop.f32.mrb[0].mxu0
        %v1943 = vadd.f32 %v1647, %v1942
        %v1944 = vpop.f32.mrb[0].mxu0
        %1945 = vmatprep.mubr.bf16.mxu0 %v1592
        %1946 = vmatmul.mubr.bf16.gmra.mrb[0].mxu0 %v1591
        %v1947 = vpop.f32.mrb[0].mxu0
        %v1948 = vadd.f32 %v1647, %v1947
        %v1949 = vpop.f32.mrb[0].mxu0
        %v1950 = vpop.f32.mrb[0].mxu0
        %v1951 = vadd.f32 %v1647, %v1950
        %v1952 = vpop.f32.mrb[0].mxu0
        %1953 = vdwg.mxu0
        %1954 = vmatprep.subr.bf16.mxu0 0
        %1955 = vmatpush1.bf16.msra.mxu0 %v1761
        %1956 = vmatprep.subr.bf16.mxu0 0
        %1957 = vmatpush1.bf16.msra.mxu0 %v1762
        %1958 = vmatprep.subr.bf16.mxu0 0
        %1959 = vmatpush1.bf16.msra.mxu0 %v1763
        %1960 = vmatprep.subr.bf16.mxu0 0
        %1961 = vmatpush1.bf16.msra.mxu0 %v1764
        %1962 = vmatprep.subr.bf16.mxu0 0
        %1963 = vmatpush1.bf16.msra.mxu0 %v1765
        %1964 = vmatprep.subr.bf16.mxu0 0
        %1965 = vmatpush1.bf16.msra.mxu0 %v1766
        %1966 = vmatprep.subr.bf16.mxu0 0
        %1967 = vmatpush1.bf16.msra.mxu0 %v1767
        %1968 = vmatprep.subr.bf16.mxu0 0
        %1969 = vmatpush1.bf16.msra.mxu0 %v1768
        %1970 = vmatprep.subr.bf16.mxu0 0
        %1971 = vmatpush1.bf16.msra.mxu0 0
        %1972 = vmatprep.subr.bf16.mxu0 0
        %1973 = vmatpush1.bf16.msra.mxu0 0
        %1974 = vmatprep.subr.bf16.mxu0 0
        %1975 = vmatpush1.bf16.msra.mxu0 0
        %1976 = vmatprep.subr.bf16.mxu0 0
        %1977 = vmatpush1.bf16.msra.mxu0 0
        %1978 = vmatprep.subr.bf16.mxu0 0
        %1979 = vmatpush1.bf16.msra.mxu0 0
        %1980 = vmatprep.subr.bf16.mxu0 0
        %1981 = vmatpush1.bf16.msra.mxu0 0
        %1982 = vmatprep.subr.bf16.mxu0 0
        %1983 = vmatpush1.bf16.msra.mxu0 0
        %1984 = vmatprep.subr.bf16.mxu0 0
        %1985 = vmatpush1.bf16.msra.mxu0 0
        %1986 = vmatprep.mubr.bf16.mxu0 0
        %1987 = vmatmul.mubr.bf16.gmra.mrb[0].mxu0 %v1548
        %v1988 = vpop.f32.mrb[0].mxu0
        %v1989 = vadd.f32 %v1828, %v1988
        %v1990 = vpop.f32.mrb[0].mxu0
        %v1991 = vpop.f32.mrb[0].mxu0
        %v1992 = vadd.f32 %v1831, %v1991
        %v1993 = vpop.f32.mrb[0].mxu0
        %1994 = vmatprep.mubr.bf16.mxu0 0
        %1995 = vmatmul.mubr.bf16.gmra.mrb[0].mxu0 %v1551
        %v1996 = vpop.f32.mrb[0].mxu0
        %v1997 = vadd.f32 %v1836, %v1996
        %v1998 = vpop.f32.mrb[0].mxu0
        %v1999 = vpop.f32.mrb[0].mxu0
        %v2000 = vadd.f32 %v1839, %v1999
        %v2001 = vpop.f32.mrb[0].mxu0
        %2002 = vmatprep.mubr.bf16.mxu0 0
        %2003 = vmatmul.mubr.bf16.gmra.mrb[0].mxu0 %v1554
        %v2004 = vpop.f32.mrb[0].mxu0
        %v2005 = vadd.f32 %v1844, %v2004
        %v2006 = vpop.f32.mrb[0].mxu0
        %v2007 = vpop.f32.mrb[0].mxu0
        %v2008 = vadd.f32 %v1847, %v2007
        %v2009 = vpop.f32.mrb[0].mxu0
        %2010 = vmatprep.mubr.bf16.mxu0 0
        %2011 = vmatmul.mubr.bf16.gmra.mrb[0].mxu0 %v1557
        %v2012 = vpop.f32.mrb[0].mxu0
        %v2013 = vadd.f32 %v1852, %v2012
        %v2014 = vpop.f32.mrb[0].mxu0
        %v2015 = vpop.f32.mrb[0].mxu0
        %v2016 = vadd.f32 %v1855, %v2015
        %v2017 = vpop.f32.mrb[0].mxu0
        %2018 = vmatprep.mubr.bf16.mxu0 0
        %2019 = vmatmul.mubr.bf16.gmra.mrb[0].mxu0 %v1560
        %v2020 = vpop.f32.mrb[0].mxu0
        %v2021 = vadd.f32 %v1860, %v2020
        %v2022 = vpop.f32.mrb[0].mxu0
        %v2023 = vpop.f32.mrb[0].mxu0
        %v2024 = vadd.f32 %v1863, %v2023
        %v2025 = vpop.f32.mrb[0].mxu0
        %2026 = vmatprep.mubr.bf16.mxu0 0
        %2027 = vmatmul.mubr.bf16.gmra.mrb[0].mxu0 %v1563
        %v2028 = vpop.f32.mrb[0].mxu0
        %v2029 = vadd.f32 %v1868, %v2028
        %v2030 = vpop.f32.mrb[0].mxu0
        %v2031 = vpop.f32.mrb[0].mxu0
        %v2032 = vadd.f32 %v1871, %v2031
        %v2033 = vpop.f32.mrb[0].mxu0
        %2034 = vmatprep.mubr.bf16.mxu0 0
        %2035 = vmatmul.mubr.bf16.gmra.mrb[0].mxu0 %v1566
        %v2036 = vpop.f32.mrb[0].mxu0
        %v2037 = vadd.f32 %v1876, %v2036
        %v2038 = vpop.f32.mrb[0].mxu0
        %v2039 = vpop.f32.mrb[0].mxu0
        %v2040 = vadd.f32 %v1879, %v2039
        %v2041 = vpop.f32.mrb[0].mxu0
        %2042 = vmatprep.mubr.bf16.mxu0 0
        %2043 = vmatmul.mubr.bf16.gmra.mrb[0].mxu0 %v1569
        %v2044 = vpop.f32.mrb[0].mxu0
        %v2045 = vadd.f32 %v1884, %v2044
        %v2046 = vpop.f32.mrb[0].mxu0
        %v2047 = vpop.f32.mrb[0].mxu0
        %v2048 = vadd.f32 %v1887, %v2047
        %v2049 = vpop.f32.mrb[0].mxu0
        %2050 = vmatprep.mubr.bf16.mxu0 0
        %2051 = vmatmul.mubr.bf16.gmra.mrb[0].mxu0 %v1572
        %v2052 = vpop.f32.mrb[0].mxu0
        %v2053 = vadd.f32 %v1892, %v2052
        %v2054 = vpop.f32.mrb[0].mxu0
        %v2055 = vpop.f32.mrb[0].mxu0
        %v2056 = vadd.f32 %v1895, %v2055
        %v2057 = vpop.f32.mrb[0].mxu0
        %2058 = vmatprep.mubr.bf16.mxu0 0
        %2059 = vmatmul.mubr.bf16.gmra.mrb[0].mxu0 %v1575
        %v2060 = vpop.f32.mrb[0].mxu0
        %v2061 = vadd.f32 %v1900, %v2060
        %v2062 = vpop.f32.mrb[0].mxu0
        %v2063 = vpop.f32.mrb[0].mxu0
        %v2064 = vadd.f32 %v1903, %v2063
        %v2065 = vpop.f32.mrb[0].mxu0
        %2066 = vmatprep.mubr.bf16.mxu0 0
        %2067 = vmatmul.mubr.bf16.gmra.mrb[0].mxu0 %v1578
        %v2068 = vpop.f32.mrb[0].mxu0
        %v2069 = vadd.f32 %v1908, %v2068
        %v2070 = vpop.f32.mrb[0].mxu0
        %v2071 = vpop.f32.mrb[0].mxu0
        %v2072 = vadd.f32 %v1911, %v2071
        %v2073 = vpop.f32.mrb[0].mxu0
        %2074 = vmatprep.mubr.bf16.mxu0 0
        %2075 = vmatmul.mubr.bf16.gmra.mrb[0].mxu0 %v1581
        %v2076 = vpop.f32.mrb[0].mxu0
        %v2077 = vadd.f32 %v1916, %v2076
        %v2078 = vpop.f32.mrb[0].mxu0
        %v2079 = vpop.f32.mrb[0].mxu0
        %v2080 = vadd.f32 %v1919, %v2079
        %v2081 = vpop.f32.mrb[0].mxu0
        %2082 = vmatprep.mubr.bf16.mxu0 0
        %2083 = vmatmul.mubr.bf16.gmra.mrb[0].mxu0 %v1584
        %v2084 = vpop.f32.mrb[0].mxu0
        %v2085 = vadd.f32 %v1924, %v2084
        %v2086 = vpop.f32.mrb[0].mxu0
        %v2087 = vpop.f32.mrb[0].mxu0
        %v2088 = vadd.f32 %v1927, %v2087
        %v2089 = vpop.f32.mrb[0].mxu0
        %2090 = vmatprep.mubr.bf16.mxu0 0
        %2091 = vmatmul.mubr.bf16.gmra.mrb[0].mxu0 %v1587
        %v2092 = vpop.f32.mrb[0].mxu0
        %v2093 = vadd.f32 %v1932, %v2092
        %v2094 = vpop.f32.mrb[0].mxu0
        %v2095 = vpop.f32.mrb[0].mxu0
        %v2096 = vadd.f32 %v1935, %v2095
        %v2097 = vpop.f32.mrb[0].mxu0
        %2098 = vmatprep.mubr.bf16.mxu0 0
        %2099 = vmatmul.mubr.bf16.gmra.mrb[0].mxu0 %v1590
        %v2100 = vpop.f32.mrb[0].mxu0
        %v2101 = vadd.f32 %v1940, %v2100
        %v2102 = vpop.f32.mrb[0].mxu0
        %v2103 = vpop.f32.mrb[0].mxu0
        %v2104 = vadd.f32 %v1943, %v2103
        %v2105 = vpop.f32.mrb[0].mxu0
        %2106 = vmatprep.mubr.bf16.mxu0 0
        %2107 = vmatmul.mubr.bf16.gmra.mrb[0].mxu0 %v1593
        %v2108 = vpop.f32.mrb[0].mxu0
        %v2109 = vadd.f32 %v1948, %v2108
        %v2110 = vpop.f32.mrb[0].mxu0
        %v2111 = vpop.f32.mrb[0].mxu0
        %v2112 = vadd.f32 %v1951, %v2111
        %v2113 = vpop.f32.mrb[0].mxu0
        %2114 = vdwg.mxu0
        %v2115 = vmax.f32 %v1989, 0.0
        %v2116 = vmax.f32 %v1992, 0.0
        %v2117 = vmax.f32 %v1997, 0.0
        %v2118 = vmax.f32 %v2000, 0.0
        %v2119 = vmax.f32 %v2005, 0.0
        %v2120 = vmax.f32 %v2008, 0.0
        %v2121 = vmax.f32 %v2013, 0.0
        %v2122 = vmax.f32 %v2016, 0.0
        %v2123 = vmax.f32 %v2021, 0.0
        %v2124 = vmax.f32 %v2024, 0.0
        %v2125 = vmax.f32 %v2029, 0.0
        %v2126 = vmax.f32 %v2032, 0.0
        %v2127 = vmax.f32 %v2037, 0.0
        %v2128 = vmax.f32 %v2040, 0.0
        %v2129 = vmax.f32 %v2045, 0.0
        %v2130 = vmax.f32 %v2048, 0.0
        %v2131 = vmax.f32 %v2053, 0.0
        %v2132 = vmax.f32 %v2056, 0.0
        %v2133 = vmax.f32 %v2061, 0.0
        %v2134 = vmax.f32 %v2064, 0.0
        %v2135 = vmax.f32 %v2069, 0.0
        %v2136 = vmax.f32 %v2072, 0.0
        %v2137 = vmax.f32 %v2077, 0.0
        %v2138 = vmax.f32 %v2080, 0.0
        %v2139 = vmax.f32 %v2085, 0.0
        %v2140 = vmax.f32 %v2088, 0.0
        %v2141 = vmax.f32 %v2093, 0.0
        %v2142 = vmax.f32 %v2096, 0.0
        %v2143 = vmax.f32 %v2101, 0.0
        %v2144 = vmax.f32 %v2104, 0.0
        %v2145 = vmax.f32 %v2109, 0.0
        %v2146 = vmax.f32 %v2112, 0.0
        %v2147 = vadd.f32 %v2115, %v2116
        %v2148 = vrot.slane %v2147, 4
        %v2149 = vadd.f32 %v2147, %v2148
        %v2150 = vrot.slane %v2149, 2
        %v2151 = vadd.f32 %v2149, %v2150
        %v2152 = vrot.slane %v2151, 1
        %v2153 = vadd.f32 %v2151, %v2152
        %v2154 = vadd.f32 %v2117, %v2118
        %v2155 = vrot.slane %v2154, 4
        %v2156 = vadd.f32 %v2154, %v2155
        %v2157 = vrot.slane %v2156, 2
        %v2158 = vadd.f32 %v2156, %v2157
        %v2159 = vrot.slane %v2158, 1
        %v2160 = vadd.f32 %v2158, %v2159
        %v2161 = vadd.f32 %v2119, %v2120
        %v2162 = vrot.slane %v2161, 4
        %v2163 = vadd.f32 %v2161, %v2162
        %v2164 = vrot.slane %v2163, 2
        %v2165 = vadd.f32 %v2163, %v2164
        %v2166 = vrot.slane %v2165, 1
        %v2167 = vadd.f32 %v2165, %v2166
        %v2168 = vadd.f32 %v2121, %v2122
        %v2169 = vrot.slane %v2168, 4
        %v2170 = vadd.f32 %v2168, %v2169
        %v2171 = vrot.slane %v2170, 2
        %v2172 = vadd.f32 %v2170, %v2171
        %v2173 = vrot.slane %v2172, 1
        %v2174 = vadd.f32 %v2172, %v2173
        %v2175 = vadd.f32 %v2123, %v2124
        %v2176 = vrot.slane %v2175, 4
        %v2177 = vadd.f32 %v2175, %v2176
        %v2178 = vrot.slane %v2177, 2
        %v2179 = vadd.f32 %v2177, %v2178
        %v2180 = vrot.slane %v2179, 1
        %v2181 = vadd.f32 %v2179, %v2180
        %v2182 = vadd.f32 %v2125, %v2126
        %v2183 = vrot.slane %v2182, 4
        %v2184 = vadd.f32 %v2182, %v2183
        %v2185 = vrot.slane %v2184, 2
        %v2186 = vadd.f32 %v2184, %v2185
        %v2187 = vrot.slane %v2186, 1
        %v2188 = vadd.f32 %v2186, %v2187
        %v2189 = vadd.f32 %v2127, %v2128
        %v2190 = vrot.slane %v2189, 4
        %v2191 = vadd.f32 %v2189, %v2190
        %v2192 = vrot.slane %v2191, 2
        %v2193 = vadd.f32 %v2191, %v2192
        %v2194 = vrot.slane %v2193, 1
        %v2195 = vadd.f32 %v2193, %v2194
        %v2196 = vadd.f32 %v2129, %v2130
        %v2197 = vrot.slane %v2196, 4
        %v2198 = vadd.f32 %v2196, %v2197
        %v2199 = vrot.slane %v2198, 2
        %v2200 = vadd.f32 %v2198, %v2199
        %v2201 = vrot.slane %v2200, 1
        %v2202 = vadd.f32 %v2200, %v2201
        %v2203 = vadd.f32 %v2131, %v2132
        %v2204 = vrot.slane %v2203, 4
        %v2205 = vadd.f32 %v2203, %v2204
        %v2206 = vrot.slane %v2205, 2
        %v2207 = vadd.f32 %v2205, %v2206
        %v2208 = vrot.slane %v2207, 1
        %v2209 = vadd.f32 %v2207, %v2208
        %v2210 = vadd.f32 %v2133, %v2134
        %v2211 = vrot.slane %v2210, 4
        %v2212 = vadd.f32 %v2210, %v2211
        %v2213 = vrot.slane %v2212, 2
        %v2214 = vadd.f32 %v2212, %v2213
        %v2215 = vrot.slane %v2214, 1
        %v2216 = vadd.f32 %v2214, %v2215
        %v2217 = vadd.f32 %v2135, %v2136
        %v2218 = vrot.slane %v2217, 4
        %v2219 = vadd.f32 %v2217, %v2218
        %v2220 = vrot.slane %v2219, 2
        %v2221 = vadd.f32 %v2219, %v2220
        %v2222 = vrot.slane %v2221, 1
        %v2223 = vadd.f32 %v2221, %v2222
        %v2224 = vadd.f32 %v2137, %v2138
        %v2225 = vrot.slane %v2224, 4
        %v2226 = vadd.f32 %v2224, %v2225
        %v2227 = vrot.slane %v2226, 2
        %v2228 = vadd.f32 %v2226, %v2227
        %v2229 = vrot.slane %v2228, 1
        %v2230 = vadd.f32 %v2228, %v2229
        %v2231 = vadd.f32 %v2139, %v2140
        %v2232 = vrot.slane %v2231, 4
        %v2233 = vadd.f32 %v2231, %v2232
        %v2234 = vrot.slane %v2233, 2
        %v2235 = vadd.f32 %v2233, %v2234
        %v2236 = vrot.slane %v2235, 1
        %v2237 = vadd.f32 %v2235, %v2236
        %v2238 = vadd.f32 %v2141, %v2142
        %v2239 = vrot.slane %v2238, 4
        %v2240 = vadd.f32 %v2238, %v2239
        %v2241 = vrot.slane %v2240, 2
        %v2242 = vadd.f32 %v2240, %v2241
        %v2243 = vrot.slane %v2242, 1
        %v2244 = vadd.f32 %v2242, %v2243
        %v2245 = vadd.f32 %v2143, %v2144
        %v2246 = vrot.slane %v2245, 4
        %v2247 = vadd.f32 %v2245, %v2246
        %v2248 = vrot.slane %v2247, 2
        %v2249 = vadd.f32 %v2247, %v2248
        %v2250 = vrot.slane %v2249, 1
        %v2251 = vadd.f32 %v2249, %v2250
        %v2252 = vadd.f32 %v2145, %v2146
        %v2253 = vrot.slane %v2252, 4
        %v2254 = vadd.f32 %v2252, %v2253
        %v2255 = vrot.slane %v2254, 2
        %v2256 = vadd.f32 %v2254, %v2255
        %v2257 = vrot.slane %v2256, 1
        %v2258 = vadd.f32 %v2256, %v2257
        %v2259 = vmul.f32 %v2153, 0.0625
        %v2260 = vmul.f32 %v2160, 0.0625
        %v2261 = vmul.f32 %v2167, 0.0625
        %v2262 = vmul.f32 %v2174, 0.0625
        %v2263 = vmul.f32 %v2181, 0.0625
        %v2264 = vmul.f32 %v2188, 0.0625
        %v2265 = vmul.f32 %v2195, 0.0625
        %v2266 = vmul.f32 %v2202, 0.0625
        %v2267 = vmul.f32 %v2209, 0.0625
        %v2268 = vmul.f32 %v2216, 0.0625
        %v2269 = vmul.f32 %v2223, 0.0625
        %v2270 = vmul.f32 %v2230, 0.0625
        %v2271 = vmul.f32 %v2237, 0.0625
        %v2272 = vmul.f32 %v2244, 0.0625
        %v2273 = vmul.f32 %v2251, 0.0625
        %v2274 = vmul.f32 %v2258, 0.0625
        %v2275 = vpack.c.bf16 %v2259, %v2259
        %v2276 = vpack.c.bf16 %v2260, %v2260
        %v2277 = vpack.c.bf16 %v2261, %v2261
        %v2278 = vpack.c.bf16 %v2262, %v2262
        %v2279 = vpack.c.bf16 %v2263, %v2263
        %v2280 = vpack.c.bf16 %v2264, %v2264
        %v2281 = vpack.c.bf16 %v2265, %v2265
        %v2282 = vpack.c.bf16 %v2266, %v2266
        %v2283 = vpack.c.bf16 %v2267, %v2267
        %v2284 = vpack.c.bf16 %v2268, %v2268
        %v2285 = vpack.c.bf16 %v2269, %v2269
        %v2286 = vpack.c.bf16 %v2270, %v2270
        %v2287 = vpack.c.bf16 %v2271, %v2271
        %v2288 = vpack.c.bf16 %v2272, %v2272
        %v2289 = vpack.c.bf16 %v2273, %v2273
        %v2290 = vpack.c.bf16 %v2274, %v2274
        %v2291 = vld [vmem:[%s5] sm:$0xf]
        %v2292 = vld [vmem:[%s5 + $0x4] sm:$0xf]
        %v2293 = vld [vmem:[%s5 + $0x8] sm:$0xf]
        %v2294 = vld [vmem:[%s5 + $0xc] sm:$0xf]
        %v2295 = vld [vmem:[%s5 + $0x10] sm:$0xf]
        %v2296 = vld [vmem:[%s5 + $0x14] sm:$0xf]
        %v2297 = vld [vmem:[%s5 + $0x18] sm:$0xf]
        %v2298 = vld [vmem:[%s5 + $0x1c] sm:$0xf]
        %v2299 = vld [vmem:[%s5 + $0x20] sm:$0xf]
        %v2300 = vld [vmem:[%s5 + $0x24] sm:$0xf]
        %v2301 = vld [vmem:[%s5 + $0x28] sm:$0xf]
        %v2302 = vld [vmem:[%s5 + $0x2c] sm:$0xf]
        %v2303 = vld [vmem:[%s5 + $0x30] sm:$0xf]
        %v2304 = vld [vmem:[%s5 + $0x34] sm:$0xf]
        %v2305 = vld [vmem:[%s5 + $0x38] sm:$0xf]
        %v2306 = vld [vmem:[%s5 + $0x3c] sm:$0xf]
        %v2307 = vld [vmem:[%s6] sm:$0x1]
        %v2309 = vlaneseq
        %v2310 = vshrl.u32 %v2309, 7
        %v2311 = vsub.s32 0, %v2310
        %v2312 = vrot.slane %v2307, %v2311
        %v2330 = vunpack.c.l.b16 %v2275
        %v2331 = vunpack.c.l.b16 %v2276
        %v2332 = vunpack.c.l.b16 %v2277
        %v2333 = vunpack.c.l.b16 %v2278
        %v2334 = vunpack.c.l.b16 %v2279
        %v2335 = vunpack.c.l.b16 %v2280
        %v2336 = vunpack.c.l.b16 %v2281
        %v2337 = vunpack.c.l.b16 %v2282
        %v2338 = vunpack.c.l.b16 %v2283
        %v2339 = vunpack.c.l.b16 %v2284
        %v2340 = vunpack.c.l.b16 %v2285
        %v2341 = vunpack.c.l.b16 %v2286
        %v2342 = vunpack.c.l.b16 %v2287
        %v2343 = vunpack.c.l.b16 %v2288
        %v2344 = vunpack.c.l.b16 %v2289
        %v2345 = vunpack.c.l.b16 %v2290
        %vm2346 = vcmask 1041409
        %v2347 = vsel %vm2346, %v2331, %v2330
        %vm2348 = vcmask 1042434
        %v2349 = vsel %vm2348, %v2332, %v2347
        %vm2350 = vcmask 1043459
        %v2351 = vsel %vm2350, %v2333, %v2349
        %vm2352 = vcmask 1044484
        %v2353 = vsel %vm2352, %v2334, %v2351
        %vm2354 = vcmask 1045509
        %v2355 = vsel %vm2354, %v2335, %v2353
        %vm2356 = vcmask 1046534
        %v2357 = vsel %vm2356, %v2336, %v2355
        %vm2358 = vcmask 1047559
        %v2359 = vsel %vm2358, %v2337, %v2357
        %v2360 = vsel %vm2346, %v2339, %v2338
        %v2361 = vsel %vm2348, %v2340, %v2360
        %v2362 = vsel %vm2350, %v2341, %v2361
        %v2363 = vsel %vm2352, %v2342, %v2362
        %v2364 = vsel %vm2354, %v2343, %v2363
        %v2365 = vsel %vm2356, %v2344, %v2364
        %v2366 = vsel %vm2358, %v2345, %v2365
        %v2367 = vpack.c.b16 %v2366, %v2359
        %v2385 = vunpack.c.l.b16 %v2291
        %v2386 = vunpack.c.l.b16 %v2292
        %v2387 = vunpack.c.l.b16 %v2293
        %v2388 = vunpack.c.l.b16 %v2294
        %v2389 = vunpack.c.l.b16 %v2295
        %v2390 = vunpack.c.l.b16 %v2296
        %v2391 = vunpack.c.l.b16 %v2297
        %v2392 = vunpack.c.l.b16 %v2298
        %v2393 = vunpack.c.l.b16 %v2299
        %v2394 = vunpack.c.l.b16 %v2300
        %v2395 = vunpack.c.l.b16 %v2301
        %v2396 = vunpack.c.l.b16 %v2302
        %v2397 = vunpack.c.l.b16 %v2303
        %v2398 = vunpack.c.l.b16 %v2304
        %v2399 = vunpack.c.l.b16 %v2305
        %v2400 = vunpack.c.l.b16 %v2306
        %v2401 = vpack.c.b16 %v2386, %v2385
        %v2402 = vpack.c.b16 %v2388, %v2387
        %v2403 = vpack.c.b16 %v2390, %v2389
        %v2404 = vpack.c.b16 %v2392, %v2391
        %v2405 = vpack.c.b16 %v2394, %v2393
        %v2406 = vpack.c.b16 %v2396, %v2395
        %v2407 = vpack.c.b16 %v2398, %v2397
        %v2408 = vpack.c.b16 %v2400, %v2399
        %2417 = vmatprep.subr.bf16.mxu0 0
        %2418 = vmatpush1.bf16.msra.mxu0 %v2401
        %2419 = vmatprep.subr.bf16.mxu0 0
        %2420 = vmatpush1.bf16.msra.mxu0 %v2402
        %2421 = vmatprep.subr.bf16.mxu0 0
        %2422 = vmatpush1.bf16.msra.mxu0 %v2403
        %2423 = vmatprep.subr.bf16.mxu0 0
        %2424 = vmatpush1.bf16.msra.mxu0 %v2404
        %2425 = vmatprep.subr.bf16.mxu0 0
        %2426 = vmatpush1.bf16.msra.mxu0 %v2405
        %2427 = vmatprep.subr.bf16.mxu0 0
        %2428 = vmatpush1.bf16.msra.mxu0 %v2406
        %2429 = vmatprep.subr.bf16.mxu0 0
        %2430 = vmatpush1.bf16.msra.mxu0 %v2407
        %2431 = vmatprep.subr.bf16.mxu0 0
        %2432 = vmatpush1.bf16.msra.mxu0 %v2408
        %2433 = vmatprep.subr.bf16.mxu0 0
        %2434 = vmatpush1.bf16.msra.mxu0 0
        %2435 = vmatprep.subr.bf16.mxu0 0
        %2436 = vmatpush1.bf16.msra.mxu0 0
        %2437 = vmatprep.subr.bf16.mxu0 0
        %2438 = vmatpush1.bf16.msra.mxu0 0
        %2439 = vmatprep.subr.bf16.mxu0 0
        %2440 = vmatpush1.bf16.msra.mxu0 0
        %2441 = vmatprep.subr.bf16.mxu0 0
        %2442 = vmatpush1.bf16.msra.mxu0 0
        %2443 = vmatprep.subr.bf16.mxu0 0
        %2444 = vmatpush1.bf16.msra.mxu0 0
        %2445 = vmatprep.subr.bf16.mxu0 0
        %2446 = vmatpush1.bf16.msra.mxu0 0
        %2447 = vmatprep.subr.bf16.mxu0 0
        %2448 = vmatpush1.bf16.msra.mxu0 0
        %2449 = vmatprep.mubr.bf16.mxu0 0
        %2450 = vmatmul.mubr.bf16.gmra.mrb[0].mxu0 %v2367
        %v2451 = vpop.f32.mrb[0].mxu0
        %v2452 = vadd.f32 %v2312, %v2451
        %v2453 = vpop.f32.mrb[0].mxu0
        %v2454 = vpop.f32.mrb[0].mxu0
        %v2455 = vadd.f32 %v2312, %v2454
        %v2456 = vpop.f32.mrb[0].mxu0
        %2457 = vdwg.mxu0
        %v2458 = vmax.f32 %v2452, 0.0
        %v2459 = vmax.f32 %v2455, 0.0
        %v2460 = vpack.c.bf16 %v2459, %v2458
        %v2461 = vld [vmem:[%s7] sm:$0xf]
        %v2462 = vld [vmem:[%s7 + $0x4] sm:$0xf]
        %v2463 = vld [vmem:[%s7 + $0x8] sm:$0xf]
        %v2464 = vld [vmem:[%s7 + $0xc] sm:$0xf]
        %v2465 = vld [vmem:[%s7 + $0x10] sm:$0xf]
        %v2466 = vld [vmem:[%s7 + $0x14] sm:$0xf]
        %v2467 = vld [vmem:[%s7 + $0x18] sm:$0xf]
        %v2468 = vld [vmem:[%s7 + $0x1c] sm:$0xf]
        %v2469 = vld [vmem:[%s7 + $0x20] sm:$0xf]
        %v2470 = vld [vmem:[%s7 + $0x24] sm:$0xf]
        %v2471 = vld [vmem:[%s7 + $0x28] sm:$0xf]
        %v2472 = vld [vmem:[%s7 + $0x2c] sm:$0xf]
        %v2473 = vld [vmem:[%s7 + $0x30] sm:$0xf]
        %v2474 = vld [vmem:[%s7 + $0x34] sm:$0xf]
        %v2475 = vld [vmem:[%s7 + $0x38] sm:$0xf]
        %v2476 = vld [vmem:[%s7 + $0x3c] sm:$0xf]
        %v2477 = vld [vmem:[%s8] sm:$0x1]
        %v2479 = vlaneseq
        %v2480 = vshrl.u32 %v2479, 7
        %v2481 = vsub.s32 0, %v2480
        %v2482 = vrot.slane %v2477, %v2481
        %v2500 = vunpack.c.l.b16 %v2461
        %v2501 = vunpack.c.l.b16 %v2462
        %v2502 = vunpack.c.l.b16 %v2463
        %v2503 = vunpack.c.l.b16 %v2464
        %v2504 = vunpack.c.l.b16 %v2465
        %v2505 = vunpack.c.l.b16 %v2466
        %v2506 = vunpack.c.l.b16 %v2467
        %v2507 = vunpack.c.l.b16 %v2468
        %v2508 = vunpack.c.l.b16 %v2469
        %v2509 = vunpack.c.l.b16 %v2470
        %v2510 = vunpack.c.l.b16 %v2471
        %v2511 = vunpack.c.l.b16 %v2472
        %v2512 = vunpack.c.l.b16 %v2473
        %v2513 = vunpack.c.l.b16 %v2474
        %v2514 = vunpack.c.l.b16 %v2475
        %v2515 = vunpack.c.l.b16 %v2476
        %v2516 = vpack.c.b16 %v2501, %v2500
        %v2517 = vpack.c.b16 %v2503, %v2502
        %v2518 = vpack.c.b16 %v2505, %v2504
        %v2519 = vpack.c.b16 %v2507, %v2506
        %v2520 = vpack.c.b16 %v2509, %v2508
        %v2521 = vpack.c.b16 %v2511, %v2510
        %v2522 = vpack.c.b16 %v2513, %v2512
        %v2523 = vpack.c.b16 %v2515, %v2514
        %2532 = vmatprep.subr.bf16.mxu0 0
        %2533 = vmatpush1.bf16.msra.mxu0 %v2516
        %2534 = vmatprep.subr.bf16.mxu0 0
        %2535 = vmatpush1.bf16.msra.mxu0 %v2517
        %2536 = vmatprep.subr.bf16.mxu0 0
        %2537 = vmatpush1.bf16.msra.mxu0 %v2518
        %2538 = vmatprep.subr.bf16.mxu0 0
        %2539 = vmatpush1.bf16.msra.mxu0 %v2519
        %2540 = vmatprep.subr.bf16.mxu0 0
        %2541 = vmatpush1.bf16.msra.mxu0 %v2520
        %2542 = vmatprep.subr.bf16.mxu0 0
        %2543 = vmatpush1.bf16.msra.mxu0 %v2521
        %2544 = vmatprep.subr.bf16.mxu0 0
        %2545 = vmatpush1.bf16.msra.mxu0 %v2522
        %2546 = vmatprep.subr.bf16.mxu0 0
        %2547 = vmatpush1.bf16.msra.mxu0 %v2523
        %2548 = vmatprep.subr.bf16.mxu0 0
        %2549 = vmatpush1.bf16.msra.mxu0 0
        %2550 = vmatprep.subr.bf16.mxu0 0
        %2551 = vmatpush1.bf16.msra.mxu0 0
        %2552 = vmatprep.subr.bf16.mxu0 0
        %2553 = vmatpush1.bf16.msra.mxu0 0
        %2554 = vmatprep.subr.bf16.mxu0 0
        %2555 = vmatpush1.bf16.msra.mxu0 0
        %2556 = vmatprep.subr.bf16.mxu0 0
        %2557 = vmatpush1.bf16.msra.mxu0 0
        %2558 = vmatprep.subr.bf16.mxu0 0
        %2559 = vmatpush1.bf16.msra.mxu0 0
        %2560 = vmatprep.subr.bf16.mxu0 0
        %2561 = vmatpush1.bf16.msra.mxu0 0
        %2562 = vmatprep.subr.bf16.mxu0 0
        %2563 = vmatpush1.bf16.msra.mxu0 0
        %2564 = vmatprep.mubr.bf16.mxu0 0
        %2565 = vmatmul.mubr.bf16.gmra.mrb[0].mxu0 %v2460
        %v2566 = vpop.f32.mrb[0].mxu0
        %v2567 = vadd.f32 %v2482, %v2566
        %v2568 = vpop.f32.mrb[0].mxu0
        %v2569 = vpop.f32.mrb[0].mxu0
        %v2570 = vadd.f32 %v2482, %v2569
        %v2571 = vpop.f32.mrb[0].mxu0
        %2572 = vdwg.mxu0
        %2573 = vst [vmem:[%s328] sm:$0xff] %v2567
        %2574 = vst [vmem:[%s328 + $0x8] sm:$0xff] %v2570
        %s2575 = sand.u32 %s225, 1
        %s2576 = scalar_lea.sflag [#allocation3], %s2575
        %s2577 = sand.u32 %s225, 1
        %s2578 = smul.addr %s2577, 16
        %s2579 = scalar_lea.vmem [#allocation2], %s2578
        // Predicated region
        $region57: #{tpu_custom_call.1} parent=55 // pred_check
          %p2580 = pneg %p235
        $region58: #{tpu_custom_call.1} parent=55 // pred_check_branch
          %2582 = sbr.rel (%p2580) target = $region60
        $region59: #{tpu_custom_call.1} parent=55 // pred_region
          %s2583 = smul.u32 2, %s23
          %s2585 = ssub.s32 256, 256
          %2586 = vsyncadd %s2576, %s2585
          %s2587 = smul.addr %s2583, 128
          %s2588 = scalar_lea.hbm %s9, %s2587
          %s2589 = sshll.u32 %s2579, 4
          %s2590 = int_to_ptr.vmem [resolvable:$true] %s2589
          %2595 = dma.vmem_to_hbm [thread:$0]  %s2590, 256, %s2588, %s2576, 128, 128, 8
        $region60: #{tpu_custom_call.1} parent=55 // pred_fallthru
          _
      $region56: #{tpu_custom_call.1} parent=5 // pred_fallthru
        _
      %p2596 = scmp.le.s32.totalorder 2, %s18
      // Predicated region
      $region61: #{tpu_custom_call.1} parent=5 // pred_check
        %p2597 = pneg %p2596
      $region62: #{tpu_custom_call.1} parent=5 // pred_check_branch
        %2599 = sbr.rel (%p2597) target = $region64
      $region63: #{tpu_custom_call.1} parent=5 // pred_region
        %s2600 = ssub.s32 %s18, 2
        // Predicated region
        $region65: #{tpu_custom_call.1} parent=63 // pred_check
          %p2601 = pneg %p241
        $region66: #{tpu_custom_call.1} parent=63 // pred_check_branch
          %2603 = sbr.rel (%p2601) target = $region68
        $region67: #{tpu_custom_call.1} parent=63 // pred_region
          %s2604 = sand.u32 %s226, 1
          %s2605 = scalar_lea.sflag [#allocation3], %s2604
          %s2606 = sand.u32 %s226, 1
          %s2607 = smul.addr %s2606, 16
          %s2608 = scalar_lea.vmem [#allocation2], %s2607
          %2609 = dma.done %s2605, 256
        $region68: #{tpu_custom_call.1} parent=63 // pred_fallthru
          _
      $region64: #{tpu_custom_call.1} parent=5 // pred_fallthru
        _
    $region6: #{tpu_custom_call.1} parent=1 // loop_footer
      %s22 = sadd.s32 1, %s18
    $region7: #{tpu_custom_call.1} parent=1 // loop_footer_branch
      %17 = sbr.rel target = $region3
    $region8: #{tpu_custom_call.1} parent=1 // loop_exit
      _
    %2610 = vsyncpa [#allocation3], 1
    %s2611 = scalar_lea.sflag [#allocation3], 1
    %2612 = vsyncpa %s2611, 1

</llo_original>
